<compile_context>
chip_gen: v6e
topology: v6e:2x2x1
jax: 0.10.0
libtpu: 0.0.40
codegen_flags: <defaults>
</compile_context>

<pallas_src>
import jax
import jax.numpy as jnp
from jax.experimental import pallas as pl
from jax.experimental.pallas import tpu as pltpu

OUT_ROWS = 8                 # sublane-replicated output rows (row 0 is the result)
MAX_TILE_B = 2048
TILE_BUCKETS = (256, 512, 1024, 2048)   # all multiples of 256 (v6e/v7x MXU width)

# (in, out) dims of the 8 Linear layers of ChessEvaluator
LAYER_DIMS = [(64, 64), (64, 64), (64, 64), (64, 32),
              (32, 32), (32, 16), (16, 16), (16, 1)]


def _round_up(x, m):
    return ((x + m - 1) // m) * m


def _num_tensorcores():
    """Best-effort TensorCore count (v7x has 2 per chip); defaults to 1."""
    try:
        info = pltpu.get_tpu_info()
        for attr in ("num_cores", "core_count", "tensorcore_count"):
            v = getattr(info, attr, None)
            if v:
                return max(1, int(v))
    except Exception:
        pass
    try:
        return max(1, int(getattr(jax.devices()[0], "num_cores", 1) or 1))
    except Exception:
        return 1


def _choose_tile_b(B, num_cores):
    """Bucketed batch tile (bounded recompiles). Single-TC chips (v5e/v6e) aim
    for one grid step; multi-TC chips (v7x) aim for >= num_cores balanced steps
    so dimension_semantics=("parallel",) shards the grid across cores."""
    target = -(-B // max(1, num_cores))          # ceil(B / num_cores)
    for t in TILE_BUCKETS:
        if t >= target:
            return t
    return MAX_TILE_B


def mlp_kernel(x_ref,
               w1, w2, w3, w4, w5, w6, w7, w8,
               b1, b2, b3, b4, b5, b6, b7, b8,
               o_ref):
    """Fused 8-layer MLP on one batch tile, batch on the lane axis.

    x_ref: (tile_b, 64) f32.  Weights: torch-layout (out, in) bf16 (last layer
    replicated to (8, 16)).  Biases: (out, 1) f32 (last layer (8, 1)).
    o_ref: (8, tile_b) f32 — all 8 rows identical; row 0 is the result.
    """
    tile_b = x_ref.shape[0]
    half = tile_b // 2                      # static; multiple of 128 (lane-aligned)

    # One XLU transpose puts the batch on lanes: h is (64, tile_b) bf16.
    ht = jnp.transpose(x_ref[...]).astype(jnp.bfloat16)
    # Two independent half-tiles -> ILP across the strictly serial layer chain.
    ha = ht[:, :half]
    hb = ht[:, half:]

    def layer(h, w, b):
        # bf16 x bf16 on the MXU, f32 accumulation; bias + ReLU in f32.
        y = jnp.dot(w, h, preferred_element_type=jnp.float32) + b
        return jnp.maximum(y, 0.0).astype(jnp.bfloat16)

    for w_ref, b_ref in ((w1, b1), (w2, b2), (w3, b3), (w4, b4),
                         (w5, b5), (w6, b6), (w7, b7)):
        w = w_ref[...]
        b = b_ref[...]
        ha = layer(ha, w, b)
        hb = layer(hb, w, b)

    # Final layer: no ReLU.  Weight/bias rows were replicated to 8 sublanes so
    # both stores are full, unmasked, lane-dense (8, half) f32 blocks.
    w = w8[...]
    b = b8[...]
    o_ref[:, :half] = jnp.dot(w, ha, preferred_element_type=jnp.float32) + b
    o_ref[:, half:] = jnp.dot(w, hb, preferred_element_type=jnp.float32) + b


def prepare_params(weights, biases):
    """One-time parameter prep (hoisted out of the per-call forward).

    weights[i]: (out, in) like torch; biases[i]: (out,).
    Returns bf16 weights kept in (out, in) layout (no transpose, no padding)
    and f32 biases reshaped to (out, 1).  The last layer's single output row
    is replicated to 8 sublanes for a full-block output store.
    """
    assert len(weights) == len(biases) == len(LAYER_DIMS)
    w_prep, b_prep = [], []
    for i, ((din, dout), w, b) in enumerate(zip(LAYER_DIMS, weights, biases)):
        assert w.shape == (dout, din), (i, w.shape, (dout, din))
        assert b.shape == (dout,), (i, b.shape, (dout,))
        wq = jnp.asarray(w, jnp.float32)
        bq = jnp.asarray(b, jnp.float32).reshape(dout, 1)
        if i == len(LAYER_DIMS) - 1:                  # replicate final row to 8 sublanes
            wq = jnp.tile(wq, (OUT_ROWS, 1))          # (8, 16)
            bq = jnp.tile(bq, (OUT_ROWS, 1))          # (8, 1)
        w_prep.append(wq.astype(jnp.bfloat16))
        b_prep.append(bq)
    return tuple(w_prep), tuple(b_prep)


def chess_evaluator_forward(x, w_prep, b_prep):
    """x: (B, 64) float32; params from prepare_params(). Returns (B, 1) f32."""
    B, din = x.shape
    assert din == LAYER_DIMS[0][0]

    tile_b = _choose_tile_b(B, _num_tensorcores())
    b_pad = _round_up(B, tile_b)
    if b_pad != B:
        x = jnp.pad(x, ((0, b_pad - B), (0, 0)))      # batch-only zero padding

    grid = (b_pad // tile_b,)
    x_spec = pl.BlockSpec((tile_b, din), lambda i: (i, 0))
    # Constant index_map -> each weight/bias is DMA'd to VMEM once and stays
    # resident across the whole grid (total params ~25 KB).
    w_specs = [pl.BlockSpec(w.shape, lambda i: (0, 0)) for w in w_prep]
    b_specs = [pl.BlockSpec(b.shape, lambda i: (0, 0)) for b in b_prep]

    out_p = pl.pallas_call(
        mlp_kernel,
        out_shape=jax.ShapeDtypeStruct((OUT_ROWS, b_pad), jnp.float32),
        grid_spec=pltpu.PrefetchScalarGridSpec(
            num_scalar_prefetch=0,
            grid=grid,
            in_specs=[x_spec] + w_specs + b_specs,
            out_specs=pl.BlockSpec((OUT_ROWS, tile_b), lambda i: (0, i)),
        ),
        compiler_params=pltpu.CompilerParams(
            dimension_semantics=("parallel",)),
    )(x, *w_prep, *b_prep)

    # Row 0 holds the result; drop padded batch columns.
    return out_p[0, :B].reshape(B, 1)


def init_params(key):
    """Deterministic synthetic parameters matching nn.Linear shapes (out, in) & (out,)."""
    weights, biases = [], []
    for i, (din, dout) in enumerate(LAYER_DIMS):
        kw, kb = jax.random.split(jax.random.fold_in(key, i))
        bound = 1.0 / (din ** 0.5)
        weights.append(jax.random.uniform(kw, (dout, din), jnp.float32, -bound, bound))
        biases.append(jax.random.uniform(kb, (dout,), jnp.float32, -bound, bound))
    return weights, biases


def reference_forward_f32(x, weights, biases):
    h = x
    for i, (w, b) in enumerate(zip(weights, biases)):
        h = h @ w.T + b
        if i < len(weights) - 1:
            h = jnp.maximum(h, 0.0)
    return h


def reference_forward_bf16(x, weights, biases):
    """Mirrors the kernel's numerics: bf16 matmul inputs, f32 accumulation/bias/ReLU."""
    h = x.astype(jnp.bfloat16)
    for i, (w, b) in enumerate(zip(weights, biases)):
        y = jnp.dot(h, w.T.astype(jnp.bfloat16),
                    preferred_element_type=jnp.float32) + b
        if i < len(weights) - 1:
            h = jnp.maximum(y, 0.0).astype(jnp.bfloat16)
        else:
            h = y
    return h


if __name__ == "__main__":
    key = jax.random.PRNGKey(0)
    kx, kp = jax.random.split(key)

    B = 96  # small test batch; padded to one 256-wide tile
    x = jax.random.normal(kx, (B, 64), jnp.float32)
    weights, biases = init_params(kp)

    # One-time parameter prep (cast/reshape hoisted out of the forward).
    w_prep, b_prep = prepare_params(weights, biases)
    w_prep = jax.block_until_ready(w_prep)

    fwd = jax.jit(chess_evaluator_forward)
    out = jax.block_until_ready(fwd(x, w_prep, b_prep))
    assert out.shape == (B, 1), out.shape

    # Tight check against a reference with matching bf16/f32 numerics.
    ref_bf16 = reference_forward_bf16(x, weights, biases)
    assert jnp.allclose(out, ref_bf16, atol=2e-3, rtol=2e-3), (
        float(jnp.max(jnp.abs(out - ref_bf16))))

    # Loose check against the full-precision f32 reference (bf16 weights/activations).
    ref_f32 = reference_forward_f32(x, weights, biases)
    assert jnp.allclose(out, ref_f32, atol=5e-2, rtol=5e-2), (
        float(jnp.max(jnp.abs(out - ref_f32))))

    print("KERNEL_OK")
</pallas_src>

<mosaic_0001>
module attributes {stable_mosaic.version = 11 : i64} {
  func.func @mlp_kernel(%arg0: i32, %arg1: memref<256x64xf32, #tpu.memory_space<vmem>>, %arg2: memref<64x64xbf16, #tpu.memory_space<vmem>>, %arg3: memref<64x64xbf16, #tpu.memory_space<vmem>>, %arg4: memref<64x64xbf16, #tpu.memory_space<vmem>>, %arg5: memref<32x64xbf16, #tpu.memory_space<vmem>>, %arg6: memref<32x32xbf16, #tpu.memory_space<vmem>>, %arg7: memref<16x32xbf16, #tpu.memory_space<vmem>>, %arg8: memref<16x16xbf16, #tpu.memory_space<vmem>>, %arg9: memref<8x16xbf16, #tpu.memory_space<vmem>>, %arg10: memref<64x1xf32, #tpu.memory_space<vmem>>, %arg11: memref<64x1xf32, #tpu.memory_space<vmem>>, %arg12: memref<64x1xf32, #tpu.memory_space<vmem>>, %arg13: memref<32x1xf32, #tpu.memory_space<vmem>>, %arg14: memref<32x1xf32, #tpu.memory_space<vmem>>, %arg15: memref<16x1xf32, #tpu.memory_space<vmem>>, %arg16: memref<16x1xf32, #tpu.memory_space<vmem>>, %arg17: memref<8x1xf32, #tpu.memory_space<vmem>>, %arg18: memref<8x256xf32, #tpu.memory_space<vmem>>) attributes {dimension_semantics = [#tpu.dimension_semantics<parallel>], iteration_bounds = array<i64: 1>, scalar_prefetch = 0 : i64, scratch_operands = 0 : i64, tpu.core_type = #tpu.core_type<tc>, window_params = [{transform_indices = @transform_0, window_bounds = array<i64: 256, 64>}, {pipeline_mode = #tpu.pipeline_mode<synchronous>, transform_indices = @transform_1, window_bounds = array<i64: 64, 64>}, {pipeline_mode = #tpu.pipeline_mode<synchronous>, transform_indices = @transform_2, window_bounds = array<i64: 64, 64>}, {pipeline_mode = #tpu.pipeline_mode<synchronous>, transform_indices = @transform_3, window_bounds = array<i64: 64, 64>}, {pipeline_mode = #tpu.pipeline_mode<synchronous>, transform_indices = @transform_4, window_bounds = array<i64: 32, 64>}, {pipeline_mode = #tpu.pipeline_mode<synchronous>, transform_indices = @transform_5, window_bounds = array<i64: 32, 32>}, {pipeline_mode = #tpu.pipeline_mode<synchronous>, transform_indices = @transform_6, window_bounds = array<i64: 16, 32>}, {pipeline_mode = #tpu.pipeline_mode<synchronous>, transform_indices = @transform_7, window_bounds = array<i64: 16, 16>}, {pipeline_mode = #tpu.pipeline_mode<synchronous>, transform_indices = @transform_8, window_bounds = array<i64: 8, 16>}, {pipeline_mode = #tpu.pipeline_mode<synchronous>, transform_indices = @transform_9, window_bounds = array<i64: 64, 1>}, {pipeline_mode = #tpu.pipeline_mode<synchronous>, transform_indices = @transform_10, window_bounds = array<i64: 64, 1>}, {pipeline_mode = #tpu.pipeline_mode<synchronous>, transform_indices = @transform_11, window_bounds = array<i64: 64, 1>}, {pipeline_mode = #tpu.pipeline_mode<synchronous>, transform_indices = @transform_12, window_bounds = array<i64: 32, 1>}, {pipeline_mode = #tpu.pipeline_mode<synchronous>, transform_indices = @transform_13, window_bounds = array<i64: 32, 1>}, {pipeline_mode = #tpu.pipeline_mode<synchronous>, transform_indices = @transform_14, window_bounds = array<i64: 16, 1>}, {pipeline_mode = #tpu.pipeline_mode<synchronous>, transform_indices = @transform_15, window_bounds = array<i64: 16, 1>}, {pipeline_mode = #tpu.pipeline_mode<synchronous>, transform_indices = @transform_16, window_bounds = array<i64: 8, 1>}, {transform_indices = @transform_17, window_bounds = array<i64: 8, 256>}]} {
    %c0 = arith.constant 0 : index
    %c0_0 = arith.constant 0 : index
    %0 = vector.load %arg1[%c0, %c0_0] : memref<256x64xf32, #tpu.memory_space<vmem>>, vector<256x64xf32>
    %1 = tpu.transpose %0, [1, 0] : vector<256x64xf32> -> vector<64x256xf32>
    %2 = arith.truncf %1 : vector<64x256xf32> to vector<64x256xbf16>
    %3 = vector.extract_strided_slice %2 {offsets = [0, 0], sizes = [64, 128], strides = [1, 1]} : vector<64x256xbf16> to vector<64x128xbf16>
    %4 = vector.extract_strided_slice %2 {offsets = [0, 128], sizes = [64, 128], strides = [1, 1]} : vector<64x256xbf16> to vector<64x128xbf16>
    %c0_1 = arith.constant 0 : index
    %c0_2 = arith.constant 0 : index
    %5 = vector.load %arg2[%c0_1, %c0_2] : memref<64x64xbf16, #tpu.memory_space<vmem>>, vector<64x64xbf16>
    %c0_3 = arith.constant 0 : index
    %c0_4 = arith.constant 0 : index
    %6 = vector.load %arg10[%c0_3, %c0_4] : memref<64x1xf32, #tpu.memory_space<vmem>>, vector<64x1xf32>
    %cst = arith.constant dense<0.000000e+00> : vector<64x128xf32>
    %7 = tpu.matmul %5, %3, %cst {dimension_numbers = #tpu.dot_dimension_numbers<[1], [0], [0], [1], [0, 0, 1, 1], [], []>} : vector<64x64xbf16>, vector<64x128xbf16>, vector<64x128xf32> -> vector<64x128xf32>
    %8 = vector.broadcast %6 : vector<64x1xf32> to vector<64x128xf32>
    %9 = arith.addf %7, %8 : vector<64x128xf32>
    %cst_5 = arith.constant 0.000000e+00 : f32
    %10 = vector.broadcast %cst_5 : f32 to vector<64x128xf32>
    %11 = arith.maximumf %9, %10 : vector<64x128xf32>
    %12 = arith.truncf %11 : vector<64x128xf32> to vector<64x128xbf16>
    %cst_6 = arith.constant dense<0.000000e+00> : vector<64x128xf32>
    %13 = tpu.matmul %5, %4, %cst_6 {dimension_numbers = #tpu.dot_dimension_numbers<[1], [0], [0], [1], [0, 0, 1, 1], [], []>} : vector<64x64xbf16>, vector<64x128xbf16>, vector<64x128xf32> -> vector<64x128xf32>
    %14 = vector.broadcast %6 : vector<64x1xf32> to vector<64x128xf32>
    %15 = arith.addf %13, %14 : vector<64x128xf32>
    %cst_7 = arith.constant 0.000000e+00 : f32
    %16 = vector.broadcast %cst_7 : f32 to vector<64x128xf32>
    %17 = arith.maximumf %15, %16 : vector<64x128xf32>
    %18 = arith.truncf %17 : vector<64x128xf32> to vector<64x128xbf16>
    %c0_8 = arith.constant 0 : index
    %c0_9 = arith.constant 0 : index
    %19 = vector.load %arg3[%c0_8, %c0_9] : memref<64x64xbf16, #tpu.memory_space<vmem>>, vector<64x64xbf16>
    %c0_10 = arith.constant 0 : index
    %c0_11 = arith.constant 0 : index
    %20 = vector.load %arg11[%c0_10, %c0_11] : memref<64x1xf32, #tpu.memory_space<vmem>>, vector<64x1xf32>
    %cst_12 = arith.constant dense<0.000000e+00> : vector<64x128xf32>
    %21 = tpu.matmul %19, %12, %cst_12 {dimension_numbers = #tpu.dot_dimension_numbers<[1], [0], [0], [1], [0, 0, 1, 1], [], []>} : vector<64x64xbf16>, vector<64x128xbf16>, vector<64x128xf32> -> vector<64x128xf32>
    %22 = vector.broadcast %20 : vector<64x1xf32> to vector<64x128xf32>
    %23 = arith.addf %21, %22 : vector<64x128xf32>
    %cst_13 = arith.constant 0.000000e+00 : f32
    %24 = vector.broadcast %cst_13 : f32 to vector<64x128xf32>
    %25 = arith.maximumf %23, %24 : vector<64x128xf32>
    %26 = arith.truncf %25 : vector<64x128xf32> to vector<64x128xbf16>
    %cst_14 = arith.constant dense<0.000000e+00> : vector<64x128xf32>
    %27 = tpu.matmul %19, %18, %cst_14 {dimension_numbers = #tpu.dot_dimension_numbers<[1], [0], [0], [1], [0, 0, 1, 1], [], []>} : vector<64x64xbf16>, vector<64x128xbf16>, vector<64x128xf32> -> vector<64x128xf32>
    %28 = vector.broadcast %20 : vector<64x1xf32> to vector<64x128xf32>
    %29 = arith.addf %27, %28 : vector<64x128xf32>
    %cst_15 = arith.constant 0.000000e+00 : f32
    %30 = vector.broadcast %cst_15 : f32 to vector<64x128xf32>
    %31 = arith.maximumf %29, %30 : vector<64x128xf32>
    %32 = arith.truncf %31 : vector<64x128xf32> to vector<64x128xbf16>
    %c0_16 = arith.constant 0 : index
    %c0_17 = arith.constant 0 : index
    %33 = vector.load %arg4[%c0_16, %c0_17] : memref<64x64xbf16, #tpu.memory_space<vmem>>, vector<64x64xbf16>
    %c0_18 = arith.constant 0 : index
    %c0_19 = arith.constant 0 : index
    %34 = vector.load %arg12[%c0_18, %c0_19] : memref<64x1xf32, #tpu.memory_space<vmem>>, vector<64x1xf32>
    %cst_20 = arith.constant dense<0.000000e+00> : vector<64x128xf32>
    %35 = tpu.matmul %33, %26, %cst_20 {dimension_numbers = #tpu.dot_dimension_numbers<[1], [0], [0], [1], [0, 0, 1, 1], [], []>} : vector<64x64xbf16>, vector<64x128xbf16>, vector<64x128xf32> -> vector<64x128xf32>
    %36 = vector.broadcast %34 : vector<64x1xf32> to vector<64x128xf32>
    %37 = arith.addf %35, %36 : vector<64x128xf32>
    %cst_21 = arith.constant 0.000000e+00 : f32
    %38 = vector.broadcast %cst_21 : f32 to vector<64x128xf32>
    %39 = arith.maximumf %37, %38 : vector<64x128xf32>
    %40 = arith.truncf %39 : vector<64x128xf32> to vector<64x128xbf16>
    %cst_22 = arith.constant dense<0.000000e+00> : vector<64x128xf32>
    %41 = tpu.matmul %33, %32, %cst_22 {dimension_numbers = #tpu.dot_dimension_numbers<[1], [0], [0], [1], [0, 0, 1, 1], [], []>} : vector<64x64xbf16>, vector<64x128xbf16>, vector<64x128xf32> -> vector<64x128xf32>
    %42 = vector.broadcast %34 : vector<64x1xf32> to vector<64x128xf32>
    %43 = arith.addf %41, %42 : vector<64x128xf32>
    %cst_23 = arith.constant 0.000000e+00 : f32
    %44 = vector.broadcast %cst_23 : f32 to vector<64x128xf32>
    %45 = arith.maximumf %43, %44 : vector<64x128xf32>
    %46 = arith.truncf %45 : vector<64x128xf32> to vector<64x128xbf16>
    %c0_24 = arith.constant 0 : index
    %c0_25 = arith.constant 0 : index
    %47 = vector.load %arg5[%c0_24, %c0_25] : memref<32x64xbf16, #tpu.memory_space<vmem>>, vector<32x64xbf16>
    %c0_26 = arith.constant 0 : index
    %c0_27 = arith.constant 0 : index
    %48 = vector.load %arg13[%c0_26, %c0_27] : memref<32x1xf32, #tpu.memory_space<vmem>>, vector<32x1xf32>
    %cst_28 = arith.constant dense<0.000000e+00> : vector<32x128xf32>
    %49 = tpu.matmul %47, %40, %cst_28 {dimension_numbers = #tpu.dot_dimension_numbers<[1], [0], [0], [1], [0, 0, 1, 1], [], []>} : vector<32x64xbf16>, vector<64x128xbf16>, vector<32x128xf32> -> vector<32x128xf32>
    %50 = vector.broadcast %48 : vector<32x1xf32> to vector<32x128xf32>
    %51 = arith.addf %49, %50 : vector<32x128xf32>
    %cst_29 = arith.constant 0.000000e+00 : f32
    %52 = vector.broadcast %cst_29 : f32 to vector<32x128xf32>
    %53 = arith.maximumf %51, %52 : vector<32x128xf32>
    %54 = arith.truncf %53 : vector<32x128xf32> to vector<32x128xbf16>
    %cst_30 = arith.constant dense<0.000000e+00> : vector<32x128xf32>
    %55 = tpu.matmul %47, %46, %cst_30 {dimension_numbers = #tpu.dot_dimension_numbers<[1], [0], [0], [1], [0, 0, 1, 1], [], []>} : vector<32x64xbf16>, vector<64x128xbf16>, vector<32x128xf32> -> vector<32x128xf32>
    %56 = vector.broadcast %48 : vector<32x1xf32> to vector<32x128xf32>
    %57 = arith.addf %55, %56 : vector<32x128xf32>
    %cst_31 = arith.constant 0.000000e+00 : f32
    %58 = vector.broadcast %cst_31 : f32 to vector<32x128xf32>
    %59 = arith.maximumf %57, %58 : vector<32x128xf32>
    %60 = arith.truncf %59 : vector<32x128xf32> to vector<32x128xbf16>
    %c0_32 = arith.constant 0 : index
    %c0_33 = arith.constant 0 : index
    %61 = vector.load %arg6[%c0_32, %c0_33] : memref<32x32xbf16, #tpu.memory_space<vmem>>, vector<32x32xbf16>
    %c0_34 = arith.constant 0 : index
    %c0_35 = arith.constant 0 : index
    %62 = vector.load %arg14[%c0_34, %c0_35] : memref<32x1xf32, #tpu.memory_space<vmem>>, vector<32x1xf32>
    %cst_36 = arith.constant dense<0.000000e+00> : vector<32x128xf32>
    %63 = tpu.matmul %61, %54, %cst_36 {dimension_numbers = #tpu.dot_dimension_numbers<[1], [0], [0], [1], [0, 0, 1, 1], [], []>} : vector<32x32xbf16>, vector<32x128xbf16>, vector<32x128xf32> -> vector<32x128xf32>
    %64 = vector.broadcast %62 : vector<32x1xf32> to vector<32x128xf32>
    %65 = arith.addf %63, %64 : vector<32x128xf32>
    %cst_37 = arith.constant 0.000000e+00 : f32
    %66 = vector.broadcast %cst_37 : f32 to vector<32x128xf32>
    %67 = arith.maximumf %65, %66 : vector<32x128xf32>
    %68 = arith.truncf %67 : vector<32x128xf32> to vector<32x128xbf16>
    %cst_38 = arith.constant dense<0.000000e+00> : vector<32x128xf32>
    %69 = tpu.matmul %61, %60, %cst_38 {dimension_numbers = #tpu.dot_dimension_numbers<[1], [0], [0], [1], [0, 0, 1, 1], [], []>} : vector<32x32xbf16>, vector<32x128xbf16>, vector<32x128xf32> -> vector<32x128xf32>
    %70 = vector.broadcast %62 : vector<32x1xf32> to vector<32x128xf32>
    %71 = arith.addf %69, %70 : vector<32x128xf32>
    %cst_39 = arith.constant 0.000000e+00 : f32
    %72 = vector.broadcast %cst_39 : f32 to vector<32x128xf32>
    %73 = arith.maximumf %71, %72 : vector<32x128xf32>
    %74 = arith.truncf %73 : vector<32x128xf32> to vector<32x128xbf16>
    %c0_40 = arith.constant 0 : index
    %c0_41 = arith.constant 0 : index
    %75 = vector.load %arg7[%c0_40, %c0_41] : memref<16x32xbf16, #tpu.memory_space<vmem>>, vector<16x32xbf16>
    %c0_42 = arith.constant 0 : index
    %c0_43 = arith.constant 0 : index
    %76 = vector.load %arg15[%c0_42, %c0_43] : memref<16x1xf32, #tpu.memory_space<vmem>>, vector<16x1xf32>
    %cst_44 = arith.constant dense<0.000000e+00> : vector<16x128xf32>
    %77 = tpu.matmul %75, %68, %cst_44 {dimension_numbers = #tpu.dot_dimension_numbers<[1], [0], [0], [1], [0, 0, 1, 1], [], []>} : vector<16x32xbf16>, vector<32x128xbf16>, vector<16x128xf32> -> vector<16x128xf32>
    %78 = vector.broadcast %76 : vector<16x1xf32> to vector<16x128xf32>
    %79 = arith.addf %77, %78 : vector<16x128xf32>
    %cst_45 = arith.constant 0.000000e+00 : f32
    %80 = vector.broadcast %cst_45 : f32 to vector<16x128xf32>
    %81 = arith.maximumf %79, %80 : vector<16x128xf32>
    %82 = arith.truncf %81 : vector<16x128xf32> to vector<16x128xbf16>
    %cst_46 = arith.constant dense<0.000000e+00> : vector<16x128xf32>
    %83 = tpu.matmul %75, %74, %cst_46 {dimension_numbers = #tpu.dot_dimension_numbers<[1], [0], [0], [1], [0, 0, 1, 1], [], []>} : vector<16x32xbf16>, vector<32x128xbf16>, vector<16x128xf32> -> vector<16x128xf32>
    %84 = vector.broadcast %76 : vector<16x1xf32> to vector<16x128xf32>
    %85 = arith.addf %83, %84 : vector<16x128xf32>
    %cst_47 = arith.constant 0.000000e+00 : f32
    %86 = vector.broadcast %cst_47 : f32 to vector<16x128xf32>
    %87 = arith.maximumf %85, %86 : vector<16x128xf32>
    %88 = arith.truncf %87 : vector<16x128xf32> to vector<16x128xbf16>
    %c0_48 = arith.constant 0 : index
    %c0_49 = arith.constant 0 : index
    %89 = vector.load %arg8[%c0_48, %c0_49] : memref<16x16xbf16, #tpu.memory_space<vmem>>, vector<16x16xbf16>
    %c0_50 = arith.constant 0 : index
    %c0_51 = arith.constant 0 : index
    %90 = vector.load %arg16[%c0_50, %c0_51] : memref<16x1xf32, #tpu.memory_space<vmem>>, vector<16x1xf32>
    %cst_52 = arith.constant dense<0.000000e+00> : vector<16x128xf32>
    %91 = tpu.matmul %89, %82, %cst_52 {dimension_numbers = #tpu.dot_dimension_numbers<[1], [0], [0], [1], [0, 0, 1, 1], [], []>} : vector<16x16xbf16>, vector<16x128xbf16>, vector<16x128xf32> -> vector<16x128xf32>
    %92 = vector.broadcast %90 : vector<16x1xf32> to vector<16x128xf32>
    %93 = arith.addf %91, %92 : vector<16x128xf32>
    %cst_53 = arith.constant 0.000000e+00 : f32
    %94 = vector.broadcast %cst_53 : f32 to vector<16x128xf32>
    %95 = arith.maximumf %93, %94 : vector<16x128xf32>
    %96 = arith.truncf %95 : vector<16x128xf32> to vector<16x128xbf16>
    %cst_54 = arith.constant dense<0.000000e+00> : vector<16x128xf32>
    %97 = tpu.matmul %89, %88, %cst_54 {dimension_numbers = #tpu.dot_dimension_numbers<[1], [0], [0], [1], [0, 0, 1, 1], [], []>} : vector<16x16xbf16>, vector<16x128xbf16>, vector<16x128xf32> -> vector<16x128xf32>
    %98 = vector.broadcast %90 : vector<16x1xf32> to vector<16x128xf32>
    %99 = arith.addf %97, %98 : vector<16x128xf32>
    %cst_55 = arith.constant 0.000000e+00 : f32
    %100 = vector.broadcast %cst_55 : f32 to vector<16x128xf32>
    %101 = arith.maximumf %99, %100 : vector<16x128xf32>
    %102 = arith.truncf %101 : vector<16x128xf32> to vector<16x128xbf16>
    %c0_56 = arith.constant 0 : index
    %c0_57 = arith.constant 0 : index
    %103 = vector.load %arg9[%c0_56, %c0_57] : memref<8x16xbf16, #tpu.memory_space<vmem>>, vector<8x16xbf16>
    %c0_58 = arith.constant 0 : index
    %c0_59 = arith.constant 0 : index
    %104 = vector.load %arg17[%c0_58, %c0_59] : memref<8x1xf32, #tpu.memory_space<vmem>>, vector<8x1xf32>
    %cst_60 = arith.constant dense<0.000000e+00> : vector<8x128xf32>
    %105 = tpu.matmul %103, %96, %cst_60 {dimension_numbers = #tpu.dot_dimension_numbers<[1], [0], [0], [1], [0, 0, 1, 1], [], []>} : vector<8x16xbf16>, vector<16x128xbf16>, vector<8x128xf32> -> vector<8x128xf32>
    %106 = vector.broadcast %104 : vector<8x1xf32> to vector<8x128xf32>
    %107 = arith.addf %105, %106 : vector<8x128xf32>
    %c0_61 = arith.constant 0 : index
    %c0_62 = arith.constant 0 : index
    %108 = vector.load %arg18[%c0_61, %c0_62] : memref<8x256xf32, #tpu.memory_space<vmem>>, vector<8x128xf32>
    tpu.vector_store %arg18[%c0_61, %c0_62], %107 {strides = array<i32>} : memref<8x256xf32, #tpu.memory_space<vmem>>, vector<8x128xf32>,
    %cst_63 = arith.constant dense<0.000000e+00> : vector<8x128xf32>
    %109 = tpu.matmul %103, %102, %cst_63 {dimension_numbers = #tpu.dot_dimension_numbers<[1], [0], [0], [1], [0, 0, 1, 1], [], []>} : vector<8x16xbf16>, vector<16x128xbf16>, vector<8x128xf32> -> vector<8x128xf32>
    %110 = vector.broadcast %104 : vector<8x1xf32> to vector<8x128xf32>
    %111 = arith.addf %109, %110 : vector<8x128xf32>
    %c0_64 = arith.constant 0 : index
    %c128 = arith.constant 128 : index
    %112 = vector.load %arg18[%c0_64, %c128] : memref<8x256xf32, #tpu.memory_space<vmem>>, vector<8x128xf32>
    tpu.vector_store %arg18[%c0_64, %c128], %111 {strides = array<i32>} : memref<8x256xf32, #tpu.memory_space<vmem>>, vector<8x128xf32>,
    return
  }
  func.func @transform_0(%arg0: i32) -> (i32, i32) {
    %c0_i32 = arith.constant 0 : i32
    %c0_i32_0 = arith.constant 0 : i32
    return %arg0, %c0_i32 : i32, i32
  }
  func.func @transform_1(%arg0: i32) -> (i32, i32) {
    %c0_i32 = arith.constant 0 : i32
    %c0_i32_0 = arith.constant 0 : i32
    %c0_i32_1 = arith.constant 0 : i32
    return %c0_i32, %c0_i32_0 : i32, i32
  }
  func.func @transform_2(%arg0: i32) -> (i32, i32) {
    %c0_i32 = arith.constant 0 : i32
    %c0_i32_0 = arith.constant 0 : i32
    %c0_i32_1 = arith.constant 0 : i32
    return %c0_i32, %c0_i32_0 : i32, i32
  }
  func.func @transform_3(%arg0: i32) -> (i32, i32) {
    %c0_i32 = arith.constant 0 : i32
    %c0_i32_0 = arith.constant 0 : i32
    %c0_i32_1 = arith.constant 0 : i32
    return %c0_i32, %c0_i32_0 : i32, i32
  }
  func.func @transform_4(%arg0: i32) -> (i32, i32) {
    %c0_i32 = arith.constant 0 : i32
    %c0_i32_0 = arith.constant 0 : i32
    %c0_i32_1 = arith.constant 0 : i32
    return %c0_i32, %c0_i32_0 : i32, i32
  }
  func.func @transform_5(%arg0: i32) -> (i32, i32) {
    %c0_i32 = arith.constant 0 : i32
    %c0_i32_0 = arith.constant 0 : i32
    %c0_i32_1 = arith.constant 0 : i32
    return %c0_i32, %c0_i32_0 : i32, i32
  }
  func.func @transform_6(%arg0: i32) -> (i32, i32) {
    %c0_i32 = arith.constant 0 : i32
    %c0_i32_0 = arith.constant 0 : i32
    %c0_i32_1 = arith.constant 0 : i32
    return %c0_i32, %c0_i32_0 : i32, i32
  }
  func.func @transform_7(%arg0: i32) -> (i32, i32) {
    %c0_i32 = arith.constant 0 : i32
    %c0_i32_0 = arith.constant 0 : i32
    %c0_i32_1 = arith.constant 0 : i32
    return %c0_i32, %c0_i32_0 : i32, i32
  }
  func.func @transform_8(%arg0: i32) -> (i32, i32) {
    %c0_i32 = arith.constant 0 : i32
    %c0_i32_0 = arith.constant 0 : i32
    %c0_i32_1 = arith.constant 0 : i32
    return %c0_i32, %c0_i32_0 : i32, i32
  }
  func.func @transform_9(%arg0: i32) -> (i32, i32) {
    %c0_i32 = arith.constant 0 : i32
    %c0_i32_0 = arith.constant 0 : i32
    %c0_i32_1 = arith.constant 0 : i32
    return %c0_i32, %c0_i32_0 : i32, i32
  }
  func.func @transform_10(%arg0: i32) -> (i32, i32) {
    %c0_i32 = arith.constant 0 : i32
    %c0_i32_0 = arith.constant 0 : i32
    %c0_i32_1 = arith.constant 0 : i32
    return %c0_i32, %c0_i32_0 : i32, i32
  }
  func.func @transform_11(%arg0: i32) -> (i32, i32) {
    %c0_i32 = arith.constant 0 : i32
    %c0_i32_0 = arith.constant 0 : i32
    %c0_i32_1 = arith.constant 0 : i32
    return %c0_i32, %c0_i32_0 : i32, i32
  }
  func.func @transform_12(%arg0: i32) -> (i32, i32) {
    %c0_i32 = arith.constant 0 : i32
    %c0_i32_0 = arith.constant 0 : i32
    %c0_i32_1 = arith.constant 0 : i32
    return %c0_i32, %c0_i32_0 : i32, i32
  }
  func.func @transform_13(%arg0: i32) -> (i32, i32) {
    %c0_i32 = arith.constant 0 : i32
    %c0_i32_0 = arith.constant 0 : i32
    %c0_i32_1 = arith.constant 0 : i32
    return %c0_i32, %c0_i32_0 : i32, i32
  }
  func.func @transform_14(%arg0: i32) -> (i32, i32) {
    %c0_i32 = arith.constant 0 : i32
    %c0_i32_0 = arith.constant 0 : i32
    %c0_i32_1 = arith.constant 0 : i32
    return %c0_i32, %c0_i32_0 : i32, i32
  }
  func.func @transform_15(%arg0: i32) -> (i32, i32) {
    %c0_i32 = arith.constant 0 : i32
    %c0_i32_0 = arith.constant 0 : i32
    %c0_i32_1 = arith.constant 0 : i32
    return %c0_i32, %c0_i32_0 : i32, i32
  }
  func.func @transform_16(%arg0: i32) -> (i32, i32) {
    %c0_i32 = arith.constant 0 : i32
    %c0_i32_0 = arith.constant 0 : i32
    %c0_i32_1 = arith.constant 0 : i32
    return %c0_i32, %c0_i32_0 : i32, i32
  }
  func.func @transform_17(%arg0: i32) -> (i32, i32) {
    %c0_i32 = arith.constant 0 : i32
    %c0_i32_0 = arith.constant 0 : i32
    return %c0_i32, %arg0 : i32, i32
  }
}

</mosaic_0001>

<llo_original>
// kernel: chess_evaluator_forward.1
$region0: #{chess_evaluator_forward.1}
  #allocation0 [shape = 'u32[]', space=smem, size = 0x4, offset = 0x4, fixed_abs, tag = 'smem constant byte address 0x4 - core index']
  #allocation1 [shape = 'u32[144,128]{1,0:T(1,128)}', space=vmem, size = 0x12000, scoped, tag = 'internal scratch']
  %s0 = inlined_call_operand.vmem [shape: f32[256,64], index: 0, kind: input, shape index: {}]
  %s1 = inlined_call_operand.vmem [shape: bf16[64,64], index: 1, kind: input, shape index: {}]
  %s2 = inlined_call_operand.vmem [shape: bf16[64,64], index: 2, kind: input, shape index: {}]
  %s3 = inlined_call_operand.vmem [shape: bf16[64,64], index: 3, kind: input, shape index: {}]
  %s4 = inlined_call_operand.vmem [shape: bf16[32,64], index: 4, kind: input, shape index: {}]
  %s5 = inlined_call_operand.vmem [shape: bf16[32,32], index: 5, kind: input, shape index: {}]
  %s6 = inlined_call_operand.vmem [shape: bf16[16,32], index: 6, kind: input, shape index: {}]
  %s7 = inlined_call_operand.vmem [shape: bf16[16,16], index: 7, kind: input, shape index: {}]
  %s8 = inlined_call_operand.vmem [shape: bf16[8,16], index: 8, kind: input, shape index: {}]
  %s9 = inlined_call_operand.vmem [shape: f32[64,1], index: 9, kind: input, shape index: {}]
  %s10 = inlined_call_operand.vmem [shape: f32[64,1], index: 10, kind: input, shape index: {}]
  %s11 = inlined_call_operand.vmem [shape: f32[64,1], index: 11, kind: input, shape index: {}]
  %s12 = inlined_call_operand.vmem [shape: f32[32,1], index: 12, kind: input, shape index: {}]
  %s13 = inlined_call_operand.vmem [shape: f32[32,1], index: 13, kind: input, shape index: {}]
  %s14 = inlined_call_operand.vmem [shape: f32[16,1], index: 14, kind: input, shape index: {}]
  %s15 = inlined_call_operand.vmem [shape: f32[16,1], index: 15, kind: input, shape index: {}]
  %s16 = inlined_call_operand.vmem [shape: f32[8,1], index: 16, kind: input, shape index: {}]
  %s17 = inlined_call_operand.vmem [shape: f32[8,256], index: 17, kind: output, shape index: {}]
  %s18 = sld [smem:[#allocation0]]
  $region78: #{chess_evaluator_forward.1} parent=0
    _
  %s20 = ssub.s32 1, %s18
  %s21 = scalar_select 0, %s20, %s18
  // Predicated region
  $region2: #{chess_evaluator_forward.1} parent=0 // pred_check
    _
  $region3: #{chess_evaluator_forward.1} parent=0 // pred_check_branch
    %23 = sbr.rel (0) target = $region5
  $region4: #{chess_evaluator_forward.1} parent=0 // pred_region
    _
  $region5: #{chess_evaluator_forward.1} parent=0 // pred_fallthru
    _
  // Predicated region
  $region6: #{chess_evaluator_forward.1} parent=0 // pred_check
    _
  $region7: #{chess_evaluator_forward.1} parent=0 // pred_check_branch
    %25 = sbr.rel (0) target = $region9
  $region8: #{chess_evaluator_forward.1} parent=0 // pred_region
    _
  $region9: #{chess_evaluator_forward.1} parent=0 // pred_fallthru
    _
  // Predicated region
  $region10: #{chess_evaluator_forward.1} parent=0 // pred_check
    _
  $region11: #{chess_evaluator_forward.1} parent=0 // pred_check_branch
    %27 = sbr.rel (0) target = $region13
  $region12: #{chess_evaluator_forward.1} parent=0 // pred_region
    _
  $region13: #{chess_evaluator_forward.1} parent=0 // pred_fallthru
    _
  // Predicated region
  $region14: #{chess_evaluator_forward.1} parent=0 // pred_check
    _
  $region15: #{chess_evaluator_forward.1} parent=0 // pred_check_branch
    %29 = sbr.rel (0) target = $region17
  $region16: #{chess_evaluator_forward.1} parent=0 // pred_region
    _
  $region17: #{chess_evaluator_forward.1} parent=0 // pred_fallthru
    _
  // Predicated region
  $region18: #{chess_evaluator_forward.1} parent=0 // pred_check
    _
  $region19: #{chess_evaluator_forward.1} parent=0 // pred_check_branch
    %31 = sbr.rel (0) target = $region21
  $region20: #{chess_evaluator_forward.1} parent=0 // pred_region
    _
  $region21: #{chess_evaluator_forward.1} parent=0 // pred_fallthru
    _
  // Predicated region
  $region22: #{chess_evaluator_forward.1} parent=0 // pred_check
    _
  $region23: #{chess_evaluator_forward.1} parent=0 // pred_check_branch
    %33 = sbr.rel (0) target = $region25
  $region24: #{chess_evaluator_forward.1} parent=0 // pred_region
    _
  $region25: #{chess_evaluator_forward.1} parent=0 // pred_fallthru
    _
  // Predicated region
  $region26: #{chess_evaluator_forward.1} parent=0 // pred_check
    _
  $region27: #{chess_evaluator_forward.1} parent=0 // pred_check_branch
    %35 = sbr.rel (0) target = $region29
  $region28: #{chess_evaluator_forward.1} parent=0 // pred_region
    _
  $region29: #{chess_evaluator_forward.1} parent=0 // pred_fallthru
    _
  // Predicated region
  $region30: #{chess_evaluator_forward.1} parent=0 // pred_check
    _
  $region31: #{chess_evaluator_forward.1} parent=0 // pred_check_branch
    %37 = sbr.rel (0) target = $region33
  $region32: #{chess_evaluator_forward.1} parent=0 // pred_region
    _
  $region33: #{chess_evaluator_forward.1} parent=0 // pred_fallthru
    _
  // Predicated region
  $region34: #{chess_evaluator_forward.1} parent=0 // pred_check
    _
  $region35: #{chess_evaluator_forward.1} parent=0 // pred_check_branch
    %39 = sbr.rel (0) target = $region37
  $region36: #{chess_evaluator_forward.1} parent=0 // pred_region
    _
  $region37: #{chess_evaluator_forward.1} parent=0 // pred_fallthru
    _
  // Predicated region
  $region38: #{chess_evaluator_forward.1} parent=0 // pred_check
    _
  $region39: #{chess_evaluator_forward.1} parent=0 // pred_check_branch
    %41 = sbr.rel (0) target = $region41
  $region40: #{chess_evaluator_forward.1} parent=0 // pred_region
    _
  $region41: #{chess_evaluator_forward.1} parent=0 // pred_fallthru
    _
  // Predicated region
  $region42: #{chess_evaluator_forward.1} parent=0 // pred_check
    _
  $region43: #{chess_evaluator_forward.1} parent=0 // pred_check_branch
    %43 = sbr.rel (0) target = $region45
  $region44: #{chess_evaluator_forward.1} parent=0 // pred_region
    _
  $region45: #{chess_evaluator_forward.1} parent=0 // pred_fallthru
    _
  // Predicated region
  $region46: #{chess_evaluator_forward.1} parent=0 // pred_check
    _
  $region47: #{chess_evaluator_forward.1} parent=0 // pred_check_branch
    %45 = sbr.rel (0) target = $region49
  $region48: #{chess_evaluator_forward.1} parent=0 // pred_region
    _
  $region49: #{chess_evaluator_forward.1} parent=0 // pred_fallthru
    _
  // Predicated region
  $region50: #{chess_evaluator_forward.1} parent=0 // pred_check
    _
  $region51: #{chess_evaluator_forward.1} parent=0 // pred_check_branch
    %47 = sbr.rel (0) target = $region53
  $region52: #{chess_evaluator_forward.1} parent=0 // pred_region
    _
  $region53: #{chess_evaluator_forward.1} parent=0 // pred_fallthru
    _
  // Predicated region
  $region54: #{chess_evaluator_forward.1} parent=0 // pred_check
    _
  $region55: #{chess_evaluator_forward.1} parent=0 // pred_check_branch
    %49 = sbr.rel (0) target = $region57
  $region56: #{chess_evaluator_forward.1} parent=0 // pred_region
    _
  $region57: #{chess_evaluator_forward.1} parent=0 // pred_fallthru
    _
  // Predicated region
  $region58: #{chess_evaluator_forward.1} parent=0 // pred_check
    _
  $region59: #{chess_evaluator_forward.1} parent=0 // pred_check_branch
    %51 = sbr.rel (0) target = $region61
  $region60: #{chess_evaluator_forward.1} parent=0 // pred_region
    _
  $region61: #{chess_evaluator_forward.1} parent=0 // pred_fallthru
    _
  // Predicated region
  $region62: #{chess_evaluator_forward.1} parent=0 // pred_check
    _
  $region63: #{chess_evaluator_forward.1} parent=0 // pred_check_branch
    %53 = sbr.rel (0) target = $region65
  $region64: #{chess_evaluator_forward.1} parent=0 // pred_region
    _
  $region65: #{chess_evaluator_forward.1} parent=0 // pred_fallthru
    _
  // Predicated region
  $region66: #{chess_evaluator_forward.1} parent=0 // pred_check
    _
  $region67: #{chess_evaluator_forward.1} parent=0 // pred_check_branch
    %55 = sbr.rel (0) target = $region69
  $region68: #{chess_evaluator_forward.1} parent=0 // pred_region
    _
  $region69: #{chess_evaluator_forward.1} parent=0 // pred_fallthru
    _
  %v57 = vld [vmem:[%s0] sm:$0xff]
  %v58 = vld [vmem:[%s0 + $0x8] sm:$0xff]
  %v59 = vld [vmem:[%s0 + $0x10] sm:$0xff]
  %v60 = vld [vmem:[%s0 + $0x18] sm:$0xff]
  %v61 = vld [vmem:[%s0 + $0x20] sm:$0xff]
  %v62 = vld [vmem:[%s0 + $0x28] sm:$0xff]
  %v63 = vld [vmem:[%s0 + $0x30] sm:$0xff]
  %v64 = vld [vmem:[%s0 + $0x38] sm:$0xff]
  %v65 = vld [vmem:[%s0 + $0x40] sm:$0xff]
  %v66 = vld [vmem:[%s0 + $0x48] sm:$0xff]
  %v67 = vld [vmem:[%s0 + $0x50] sm:$0xff]
  %v68 = vld [vmem:[%s0 + $0x58] sm:$0xff]
  %v69 = vld [vmem:[%s0 + $0x60] sm:$0xff]
  %v70 = vld [vmem:[%s0 + $0x68] sm:$0xff]
  %v71 = vld [vmem:[%s0 + $0x70] sm:$0xff]
  %v72 = vld [vmem:[%s0 + $0x78] sm:$0xff]
  %v73 = vld [vmem:[%s0 + $0x80] sm:$0xff]
  %v74 = vld [vmem:[%s0 + $0x88] sm:$0xff]
  %v75 = vld [vmem:[%s0 + $0x90] sm:$0xff]
  %v76 = vld [vmem:[%s0 + $0x98] sm:$0xff]
  %v77 = vld [vmem:[%s0 + $0xa0] sm:$0xff]
  %v78 = vld [vmem:[%s0 + $0xa8] sm:$0xff]
  %v79 = vld [vmem:[%s0 + $0xb0] sm:$0xff]
  %v80 = vld [vmem:[%s0 + $0xb8] sm:$0xff]
  %v81 = vld [vmem:[%s0 + $0xc0] sm:$0xff]
  %v82 = vld [vmem:[%s0 + $0xc8] sm:$0xff]
  %v83 = vld [vmem:[%s0 + $0xd0] sm:$0xff]
  %v84 = vld [vmem:[%s0 + $0xd8] sm:$0xff]
  %v85 = vld [vmem:[%s0 + $0xe0] sm:$0xff]
  %v86 = vld [vmem:[%s0 + $0xe8] sm:$0xff]
  %v87 = vld [vmem:[%s0 + $0xf0] sm:$0xff]
  %v88 = vld [vmem:[%s0 + $0xf8] sm:$0xff]
  %89 = vxpose.xlu0.b32.start [1/16] %v57, 128
  %90 = vxpose.xlu0.b32.cont [2/16] %v58, 128
  %91 = vxpose.xlu0.b32.cont [3/16] %v59, 128
  %92 = vxpose.xlu0.b32.cont [4/16] %v60, 128
  %93 = vxpose.xlu0.b32.cont [5/16] %v61, 128
  %94 = vxpose.xlu0.b32.cont [6/16] %v62, 128
  %95 = vxpose.xlu0.b32.cont [7/16] %v63, 128
  %96 = vxpose.xlu0.b32.cont [8/16] %v64, 128
  %97 = vxpose.xlu0.b32.cont [9/16] %v65, 128
  %98 = vxpose.xlu0.b32.cont [10/16] %v66, 128
  %99 = vxpose.xlu0.b32.cont [11/16] %v67, 128
  %100 = vxpose.xlu0.b32.cont [12/16] %v68, 128
  %101 = vxpose.xlu0.b32.cont [13/16] %v69, 128
  %102 = vxpose.xlu0.b32.cont [14/16] %v70, 128
  %103 = vxpose.xlu0.b32.cont [15/16] %v71, 128
  %104 = vxpose.xlu0.b32.end [16/16] %v72, 128
  %v105 = vpop.trf.xlu0
  %v106 = vpop.trf.xlu0
  %v107 = vpop.trf.xlu0
  %v108 = vpop.trf.xlu0
  %v109 = vpop.trf.xlu0
  %v110 = vpop.trf.xlu0
  %v111 = vpop.trf.xlu0
  %v112 = vpop.trf.xlu0
  %v113 = vpop.trf.xlu0
  %v114 = vpop.trf.xlu0
  %v115 = vpop.trf.xlu0
  %v116 = vpop.trf.xlu0
  %v117 = vpop.trf.xlu0
  %v118 = vpop.trf.xlu0
  %v119 = vpop.trf.xlu0
  %v120 = vpop.trf.xlu0
  %121 = vxpose.xlu0.b32.start [1/16] %v73, 128
  %122 = vxpose.xlu0.b32.cont [2/16] %v74, 128
  %123 = vxpose.xlu0.b32.cont [3/16] %v75, 128
  %124 = vxpose.xlu0.b32.cont [4/16] %v76, 128
  %125 = vxpose.xlu0.b32.cont [5/16] %v77, 128
  %126 = vxpose.xlu0.b32.cont [6/16] %v78, 128
  %127 = vxpose.xlu0.b32.cont [7/16] %v79, 128
  %128 = vxpose.xlu0.b32.cont [8/16] %v80, 128
  %129 = vxpose.xlu0.b32.cont [9/16] %v81, 128
  %130 = vxpose.xlu0.b32.cont [10/16] %v82, 128
  %131 = vxpose.xlu0.b32.cont [11/16] %v83, 128
  %132 = vxpose.xlu0.b32.cont [12/16] %v84, 128
  %133 = vxpose.xlu0.b32.cont [13/16] %v85, 128
  %134 = vxpose.xlu0.b32.cont [14/16] %v86, 128
  %135 = vxpose.xlu0.b32.cont [15/16] %v87, 128
  %136 = vxpose.xlu0.b32.end [16/16] %v88, 128
  %v137 = vpop.trf.xlu0
  %v138 = vpop.trf.xlu0
  %v139 = vpop.trf.xlu0
  %v140 = vpop.trf.xlu0
  %v141 = vpop.trf.xlu0
  %v142 = vpop.trf.xlu0
  %v143 = vpop.trf.xlu0
  %v144 = vpop.trf.xlu0
  %v145 = vpop.trf.xlu0
  %v146 = vpop.trf.xlu0
  %v147 = vpop.trf.xlu0
  %v148 = vpop.trf.xlu0
  %v149 = vpop.trf.xlu0
  %v150 = vpop.trf.xlu0
  %v151 = vpop.trf.xlu0
  %v152 = vpop.trf.xlu0
  %v153 = vpack.c.bf16 %v106, %v105
  %v154 = vpack.c.bf16 %v138, %v137
  %v155 = vpack.c.bf16 %v108, %v107
  %v156 = vpack.c.bf16 %v140, %v139
  %v157 = vpack.c.bf16 %v110, %v109
  %v158 = vpack.c.bf16 %v142, %v141
  %v159 = vpack.c.bf16 %v112, %v111
  %v160 = vpack.c.bf16 %v144, %v143
  %v161 = vld [vmem:[%s1] sm:$0xf]
  %v162 = vld [vmem:[%s1 + $0x4] sm:$0xf]
  %v163 = vld [vmem:[%s1 + $0x8] sm:$0xf]
  %v164 = vld [vmem:[%s1 + $0xc] sm:$0xf]
  %v165 = vld [vmem:[%s1 + $0x10] sm:$0xf]
  %v166 = vld [vmem:[%s1 + $0x14] sm:$0xf]
  %v167 = vld [vmem:[%s1 + $0x18] sm:$0xf]
  %v168 = vld [vmem:[%s1 + $0x1c] sm:$0xf]
  %v169 = vld [vmem:[%s9] sm:$0xff]
  %v170 = vld [vmem:[%s9 + $0x8] sm:$0xff]
  %v171 = vld [vmem:[%s9 + $0x10] sm:$0xff]
  %v172 = vld [vmem:[%s9 + $0x18] sm:$0xff]
  %v173 = vld [vmem:[%s9 + $0x20] sm:$0xff]
  %v174 = vld [vmem:[%s9 + $0x28] sm:$0xff]
  %v175 = vld [vmem:[%s9 + $0x30] sm:$0xff]
  %v176 = vld [vmem:[%s9 + $0x38] sm:$0xff]
  %178 = vset.pattern.permute.xlu0 0
  %179 = vperm.xlu0 %178, %v169
  %v180 = vpop.permute.xlu0 %179
  %183 = vset.pattern.permute.xlu0 0
  %184 = vperm.xlu0 %183, %v170
  %v185 = vpop.permute.xlu0 %184
  %188 = vset.pattern.permute.xlu0 0
  %189 = vperm.xlu0 %188, %v171
  %v190 = vpop.permute.xlu0 %189
  %193 = vset.pattern.permute.xlu0 0
  %194 = vperm.xlu0 %193, %v172
  %v195 = vpop.permute.xlu0 %194
  %198 = vset.pattern.permute.xlu0 0
  %199 = vperm.xlu0 %198, %v173
  %v200 = vpop.permute.xlu0 %199
  %203 = vset.pattern.permute.xlu0 0
  %204 = vperm.xlu0 %203, %v174
  %v205 = vpop.permute.xlu0 %204
  %208 = vset.pattern.permute.xlu0 0
  %209 = vperm.xlu0 %208, %v175
  %v210 = vpop.permute.xlu0 %209
  %213 = vset.pattern.permute.xlu0 0
  %214 = vperm.xlu0 %213, %v176
  %v215 = vpop.permute.xlu0 %214
  %v225 = vunpack.c.l.b16 %v161
  %v226 = vunpack.c.l.b16 %v162
  %v227 = vunpack.c.l.b16 %v163
  %v228 = vunpack.c.l.b16 %v164
  %v229 = vunpack.c.l.b16 %v165
  %v230 = vunpack.c.l.b16 %v166
  %v231 = vunpack.c.l.b16 %v167
  %v232 = vunpack.c.l.b16 %v168
  %v233 = vpack.c.b16 %v226, %v225
  %v234 = vpack.c.b16 %v228, %v227
  %v235 = vpack.c.b16 %v230, %v229
  %v236 = vpack.c.b16 %v232, %v231
  %vm237 = vcmask 523264
  %v239 = vsel %vm237, %v233, 0
  %v242 = vsel %vm237, %v234, 0
  %v245 = vsel %vm237, %v235, 0
  %v248 = vsel %vm237, %v236, 0
  %250 = vmatprep.subr.bf16.mxu0 0
  %251 = vmatpush1.bf16.msra.mxu0 0
  %252 = vmatprep.subr.bf16.mxu0 0
  %253 = vmatpush1.bf16.msra.mxu0 0
  %254 = vmatprep.subr.bf16.mxu0 0
  %255 = vmatpush1.bf16.msra.mxu0 0
  %256 = vmatprep.subr.bf16.mxu0 0
  %257 = vmatpush1.bf16.msra.mxu0 0
  %258 = vmatprep.subr.bf16.mxu0 0
  %259 = vmatpush1.bf16.msra.mxu0 %v159
  %260 = vmatprep.subr.bf16.mxu0 0
  %261 = vmatpush1.bf16.msra.mxu0 %v157
  %262 = vmatprep.subr.bf16.mxu0 0
  %263 = vmatpush1.bf16.msra.mxu0 %v155
  %264 = vmatprep.subr.bf16.mxu0 0
  %265 = vmatpush1.bf16.msra.mxu0 %v153
  %266 = vmatprep.subr.bf16.mxu0 0
  %267 = vmatpush2.bf16.msra.mxu0 0
  %268 = vmatprep.subr.bf16.mxu0 0
  %269 = vmatpush2.bf16.msra.mxu0 0
  %270 = vmatprep.subr.bf16.mxu0 0
  %271 = vmatpush2.bf16.msra.mxu0 0
  %272 = vmatprep.subr.bf16.mxu0 0
  %273 = vmatpush2.bf16.msra.mxu0 0
  %274 = vmatprep.subr.bf16.mxu0 0
  %275 = vmatpush2.bf16.msra.mxu0 0
  %276 = vmatprep.subr.bf16.mxu0 0
  %277 = vmatpush2.bf16.msra.mxu0 0
  %278 = vmatprep.subr.bf16.mxu0 0
  %279 = vmatpush2.bf16.msra.mxu0 0
  %280 = vmatprep.subr.bf16.mxu0 0
  %281 = vmatpush2.bf16.msra.mxu0 0
  %282 = vmatprep.mubr.bf16.mxu0 0
  %283 = vmatmul.mubr.bf16.gmra.mxu0 %v239
  %v284 = vpop.f32.mrf.mxu0
  %v285 = vadd.f32 %v180, %v284
  %v286 = vpop.f32.mrf.mxu0
  %v287 = vpop.f32.mrf.mxu0
  %v288 = vadd.f32 %v185, %v287
  %v289 = vpop.f32.mrf.mxu0
  %290 = vmatprep.mubr.bf16.mxu0 0
  %291 = vmatmul.mubr.bf16.gmra.mxu0 %v242
  %v292 = vpop.f32.mrf.mxu0
  %v293 = vadd.f32 %v190, %v292
  %v294 = vpop.f32.mrf.mxu0
  %v295 = vpop.f32.mrf.mxu0
  %v296 = vadd.f32 %v195, %v295
  %v297 = vpop.f32.mrf.mxu0
  %298 = vmatprep.mubr.bf16.mxu0 0
  %299 = vmatmul.mubr.bf16.gmra.mxu0 %v245
  %v300 = vpop.f32.mrf.mxu0
  %v301 = vadd.f32 %v200, %v300
  %v302 = vpop.f32.mrf.mxu0
  %v303 = vpop.f32.mrf.mxu0
  %v304 = vadd.f32 %v205, %v303
  %v305 = vpop.f32.mrf.mxu0
  %306 = vmatprep.mubr.bf16.mxu0 0
  %307 = vmatmul.mubr.bf16.gmra.mxu0 %v248
  %v308 = vpop.f32.mrf.mxu0
  %v309 = vadd.f32 %v210, %v308
  %v310 = vpop.f32.mrf.mxu0
  %v311 = vpop.f32.mrf.mxu0
  %v312 = vadd.f32 %v215, %v311
  %v313 = vpop.f32.mrf.mxu0
  %314 = vdwg.mxu0
  %v315 = vmax.f32 %v285, 0.0
  %v316 = vmax.f32 %v288, 0.0
  %v317 = vmax.f32 %v293, 0.0
  %v318 = vmax.f32 %v296, 0.0
  %v319 = vmax.f32 %v301, 0.0
  %v320 = vmax.f32 %v304, 0.0
  %v321 = vmax.f32 %v309, 0.0
  %v322 = vmax.f32 %v312, 0.0
  %v323 = vpack.c.bf16 %v316, %v315
  %v324 = vpack.c.bf16 %v318, %v317
  %v325 = vpack.c.bf16 %v320, %v319
  %v326 = vpack.c.bf16 %v322, %v321
  %327 = vmatprep.subr.bf16.mxu0 0
  %328 = vmatpush1.bf16.msra.mxu0 0
  %329 = vmatprep.subr.bf16.mxu0 0
  %330 = vmatpush1.bf16.msra.mxu0 0
  %331 = vmatprep.subr.bf16.mxu0 0
  %332 = vmatpush1.bf16.msra.mxu0 0
  %333 = vmatprep.subr.bf16.mxu0 0
  %334 = vmatpush1.bf16.msra.mxu0 0
  %335 = vmatprep.subr.bf16.mxu0 0
  %336 = vmatpush1.bf16.msra.mxu0 %v160
  %337 = vmatprep.subr.bf16.mxu0 0
  %338 = vmatpush1.bf16.msra.mxu0 %v158
  %339 = vmatprep.subr.bf16.mxu0 0
  %340 = vmatpush1.bf16.msra.mxu0 %v156
  %341 = vmatprep.subr.bf16.mxu0 0
  %342 = vmatpush1.bf16.msra.mxu0 %v154
  %343 = vmatprep.subr.bf16.mxu0 0
  %344 = vmatpush2.bf16.msra.mxu0 0
  %345 = vmatprep.subr.bf16.mxu0 0
  %346 = vmatpush2.bf16.msra.mxu0 0
  %347 = vmatprep.subr.bf16.mxu0 0
  %348 = vmatpush2.bf16.msra.mxu0 0
  %349 = vmatprep.subr.bf16.mxu0 0
  %350 = vmatpush2.bf16.msra.mxu0 0
  %351 = vmatprep.subr.bf16.mxu0 0
  %352 = vmatpush2.bf16.msra.mxu0 0
  %353 = vmatprep.subr.bf16.mxu0 0
  %354 = vmatpush2.bf16.msra.mxu0 0
  %355 = vmatprep.subr.bf16.mxu0 0
  %356 = vmatpush2.bf16.msra.mxu0 0
  %357 = vmatprep.subr.bf16.mxu0 0
  %358 = vmatpush2.bf16.msra.mxu0 0
  %359 = vmatprep.mubr.bf16.mxu0 0
  %360 = vmatmul.mubr.bf16.gmra.mxu0 %v239
  %v361 = vpop.f32.mrf.mxu0
  %v362 = vadd.f32 %v180, %v361
  %v363 = vpop.f32.mrf.mxu0
  %v364 = vpop.f32.mrf.mxu0
  %v365 = vadd.f32 %v185, %v364
  %v366 = vpop.f32.mrf.mxu0
  %367 = vmatprep.mubr.bf16.mxu0 0
  %368 = vmatmul.mubr.bf16.gmra.mxu0 %v242
  %v369 = vpop.f32.mrf.mxu0
  %v370 = vadd.f32 %v190, %v369
  %v371 = vpop.f32.mrf.mxu0
  %v372 = vpop.f32.mrf.mxu0
  %v373 = vadd.f32 %v195, %v372
  %v374 = vpop.f32.mrf.mxu0
  %375 = vmatprep.mubr.bf16.mxu0 0
  %376 = vmatmul.mubr.bf16.gmra.mxu0 %v245
  %v377 = vpop.f32.mrf.mxu0
  %v378 = vadd.f32 %v200, %v377
  %v379 = vpop.f32.mrf.mxu0
  %v380 = vpop.f32.mrf.mxu0
  %v381 = vadd.f32 %v205, %v380
  %v382 = vpop.f32.mrf.mxu0
  %383 = vmatprep.mubr.bf16.mxu0 0
  %384 = vmatmul.mubr.bf16.gmra.mxu0 %v248
  %v385 = vpop.f32.mrf.mxu0
  %v386 = vadd.f32 %v210, %v385
  %v387 = vpop.f32.mrf.mxu0
  %v388 = vpop.f32.mrf.mxu0
  %v389 = vadd.f32 %v215, %v388
  %v390 = vpop.f32.mrf.mxu0
  %391 = vdwg.mxu0
  %v392 = vmax.f32 %v362, 0.0
  %v393 = vmax.f32 %v365, 0.0
  %v394 = vmax.f32 %v370, 0.0
  %v395 = vmax.f32 %v373, 0.0
  %v396 = vmax.f32 %v378, 0.0
  %v397 = vmax.f32 %v381, 0.0
  %v398 = vmax.f32 %v386, 0.0
  %v399 = vmax.f32 %v389, 0.0
  %v400 = vpack.c.bf16 %v393, %v392
  %v401 = vpack.c.bf16 %v395, %v394
  %v402 = vpack.c.bf16 %v397, %v396
  %v403 = vpack.c.bf16 %v399, %v398
  %v404 = vld [vmem:[%s2] sm:$0xf]
  %v405 = vld [vmem:[%s2 + $0x4] sm:$0xf]
  %v406 = vld [vmem:[%s2 + $0x8] sm:$0xf]
  %v407 = vld [vmem:[%s2 + $0xc] sm:$0xf]
  %v408 = vld [vmem:[%s2 + $0x10] sm:$0xf]
  %v409 = vld [vmem:[%s2 + $0x14] sm:$0xf]
  %v410 = vld [vmem:[%s2 + $0x18] sm:$0xf]
  %v411 = vld [vmem:[%s2 + $0x1c] sm:$0xf]
  %v412 = vld [vmem:[%s10] sm:$0xff]
  %v413 = vld [vmem:[%s10 + $0x8] sm:$0xff]
  %v414 = vld [vmem:[%s10 + $0x10] sm:$0xff]
  %v415 = vld [vmem:[%s10 + $0x18] sm:$0xff]
  %v416 = vld [vmem:[%s10 + $0x20] sm:$0xff]
  %v417 = vld [vmem:[%s10 + $0x28] sm:$0xff]
  %v418 = vld [vmem:[%s10 + $0x30] sm:$0xff]
  %v419 = vld [vmem:[%s10 + $0x38] sm:$0xff]
  %421 = vset.pattern.permute.xlu0 0
  %422 = vperm.xlu0 %421, %v412
  %v423 = vpop.permute.xlu0 %422
  %426 = vset.pattern.permute.xlu0 0
  %427 = vperm.xlu0 %426, %v413
  %v428 = vpop.permute.xlu0 %427
  %431 = vset.pattern.permute.xlu0 0
  %432 = vperm.xlu0 %431, %v414
  %v433 = vpop.permute.xlu0 %432
  %436 = vset.pattern.permute.xlu0 0
  %437 = vperm.xlu0 %436, %v415
  %v438 = vpop.permute.xlu0 %437
  %441 = vset.pattern.permute.xlu0 0
  %442 = vperm.xlu0 %441, %v416
  %v443 = vpop.permute.xlu0 %442
  %446 = vset.pattern.permute.xlu0 0
  %447 = vperm.xlu0 %446, %v417
  %v448 = vpop.permute.xlu0 %447
  %451 = vset.pattern.permute.xlu0 0
  %452 = vperm.xlu0 %451, %v418
  %v453 = vpop.permute.xlu0 %452
  %456 = vset.pattern.permute.xlu0 0
  %457 = vperm.xlu0 %456, %v419
  %v458 = vpop.permute.xlu0 %457
  %v468 = vunpack.c.l.b16 %v404
  %v469 = vunpack.c.l.b16 %v405
  %v470 = vunpack.c.l.b16 %v406
  %v471 = vunpack.c.l.b16 %v407
  %v472 = vunpack.c.l.b16 %v408
  %v473 = vunpack.c.l.b16 %v409
  %v474 = vunpack.c.l.b16 %v410
  %v475 = vunpack.c.l.b16 %v411
  %v476 = vpack.c.b16 %v469, %v468
  %v477 = vpack.c.b16 %v471, %v470
  %v478 = vpack.c.b16 %v473, %v472
  %v479 = vpack.c.b16 %v475, %v474
  %v481 = vsel %vm237, %v476, 0
  %v484 = vsel %vm237, %v477, 0
  %v487 = vsel %vm237, %v478, 0
  %v490 = vsel %vm237, %v479, 0
  %492 = vmatprep.subr.bf16.mxu0 0
  %493 = vmatpush1.bf16.msra.mxu0 0
  %494 = vmatprep.subr.bf16.mxu0 0
  %495 = vmatpush1.bf16.msra.mxu0 0
  %496 = vmatprep.subr.bf16.mxu0 0
  %497 = vmatpush1.bf16.msra.mxu0 0
  %498 = vmatprep.subr.bf16.mxu0 0
  %499 = vmatpush1.bf16.msra.mxu0 0
  %500 = vmatprep.subr.bf16.mxu0 0
  %501 = vmatpush1.bf16.msra.mxu0 %v326
  %502 = vmatprep.subr.bf16.mxu0 0
  %503 = vmatpush1.bf16.msra.mxu0 %v325
  %504 = vmatprep.subr.bf16.mxu0 0
  %505 = vmatpush1.bf16.msra.mxu0 %v324
  %506 = vmatprep.subr.bf16.mxu0 0
  %507 = vmatpush1.bf16.msra.mxu0 %v323
  %508 = vmatprep.subr.bf16.mxu0 0
  %509 = vmatpush2.bf16.msra.mxu0 0
  %510 = vmatprep.subr.bf16.mxu0 0
  %511 = vmatpush2.bf16.msra.mxu0 0
  %512 = vmatprep.subr.bf16.mxu0 0
  %513 = vmatpush2.bf16.msra.mxu0 0
  %514 = vmatprep.subr.bf16.mxu0 0
  %515 = vmatpush2.bf16.msra.mxu0 0
  %516 = vmatprep.subr.bf16.mxu0 0
  %517 = vmatpush2.bf16.msra.mxu0 0
  %518 = vmatprep.subr.bf16.mxu0 0
  %519 = vmatpush2.bf16.msra.mxu0 0
  %520 = vmatprep.subr.bf16.mxu0 0
  %521 = vmatpush2.bf16.msra.mxu0 0
  %522 = vmatprep.subr.bf16.mxu0 0
  %523 = vmatpush2.bf16.msra.mxu0 0
  %524 = vmatprep.mubr.bf16.mxu0 0
  %525 = vmatmul.mubr.bf16.gmra.mxu0 %v481
  %v526 = vpop.f32.mrf.mxu0
  %v527 = vadd.f32 %v423, %v526
  %v528 = vpop.f32.mrf.mxu0
  %v529 = vpop.f32.mrf.mxu0
  %v530 = vadd.f32 %v428, %v529
  %v531 = vpop.f32.mrf.mxu0
  %532 = vmatprep.mubr.bf16.mxu0 0
  %533 = vmatmul.mubr.bf16.gmra.mxu0 %v484
  %v534 = vpop.f32.mrf.mxu0
  %v535 = vadd.f32 %v433, %v534
  %v536 = vpop.f32.mrf.mxu0
  %v537 = vpop.f32.mrf.mxu0
  %v538 = vadd.f32 %v438, %v537
  %v539 = vpop.f32.mrf.mxu0
  %540 = vmatprep.mubr.bf16.mxu0 0
  %541 = vmatmul.mubr.bf16.gmra.mxu0 %v487
  %v542 = vpop.f32.mrf.mxu0
  %v543 = vadd.f32 %v443, %v542
  %v544 = vpop.f32.mrf.mxu0
  %v545 = vpop.f32.mrf.mxu0
  %v546 = vadd.f32 %v448, %v545
  %v547 = vpop.f32.mrf.mxu0
  %548 = vmatprep.mubr.bf16.mxu0 0
  %549 = vmatmul.mubr.bf16.gmra.mxu0 %v490
  %v550 = vpop.f32.mrf.mxu0
  %v551 = vadd.f32 %v453, %v550
  %v552 = vpop.f32.mrf.mxu0
  %v553 = vpop.f32.mrf.mxu0
  %v554 = vadd.f32 %v458, %v553
  %v555 = vpop.f32.mrf.mxu0
  %556 = vdwg.mxu0
  %v557 = vmax.f32 %v527, 0.0
  %v558 = vmax.f32 %v530, 0.0
  %v559 = vmax.f32 %v535, 0.0
  %v560 = vmax.f32 %v538, 0.0
  %v561 = vmax.f32 %v543, 0.0
  %v562 = vmax.f32 %v546, 0.0
  %v563 = vmax.f32 %v551, 0.0
  %v564 = vmax.f32 %v554, 0.0
  %v565 = vpack.c.bf16 %v558, %v557
  %v566 = vpack.c.bf16 %v560, %v559
  %v567 = vpack.c.bf16 %v562, %v561
  %v568 = vpack.c.bf16 %v564, %v563
  %569 = vmatprep.subr.bf16.mxu0 0
  %570 = vmatpush1.bf16.msra.mxu0 0
  %571 = vmatprep.subr.bf16.mxu0 0
  %572 = vmatpush1.bf16.msra.mxu0 0
  %573 = vmatprep.subr.bf16.mxu0 0
  %574 = vmatpush1.bf16.msra.mxu0 0
  %575 = vmatprep.subr.bf16.mxu0 0
  %576 = vmatpush1.bf16.msra.mxu0 0
  %577 = vmatprep.subr.bf16.mxu0 0
  %578 = vmatpush1.bf16.msra.mxu0 %v403
  %579 = vmatprep.subr.bf16.mxu0 0
  %580 = vmatpush1.bf16.msra.mxu0 %v402
  %581 = vmatprep.subr.bf16.mxu0 0
  %582 = vmatpush1.bf16.msra.mxu0 %v401
  %583 = vmatprep.subr.bf16.mxu0 0
  %584 = vmatpush1.bf16.msra.mxu0 %v400
  %585 = vmatprep.subr.bf16.mxu0 0
  %586 = vmatpush2.bf16.msra.mxu0 0
  %587 = vmatprep.subr.bf16.mxu0 0
  %588 = vmatpush2.bf16.msra.mxu0 0
  %589 = vmatprep.subr.bf16.mxu0 0
  %590 = vmatpush2.bf16.msra.mxu0 0
  %591 = vmatprep.subr.bf16.mxu0 0
  %592 = vmatpush2.bf16.msra.mxu0 0
  %593 = vmatprep.subr.bf16.mxu0 0
  %594 = vmatpush2.bf16.msra.mxu0 0
  %595 = vmatprep.subr.bf16.mxu0 0
  %596 = vmatpush2.bf16.msra.mxu0 0
  %597 = vmatprep.subr.bf16.mxu0 0
  %598 = vmatpush2.bf16.msra.mxu0 0
  %599 = vmatprep.subr.bf16.mxu0 0
  %600 = vmatpush2.bf16.msra.mxu0 0
  %601 = vmatprep.mubr.bf16.mxu0 0
  %602 = vmatmul.mubr.bf16.gmra.mxu0 %v481
  %v603 = vpop.f32.mrf.mxu0
  %v604 = vadd.f32 %v423, %v603
  %v605 = vpop.f32.mrf.mxu0
  %v606 = vpop.f32.mrf.mxu0
  %v607 = vadd.f32 %v428, %v606
  %v608 = vpop.f32.mrf.mxu0
  %609 = vmatprep.mubr.bf16.mxu0 0
  %610 = vmatmul.mubr.bf16.gmra.mxu0 %v484
  %v611 = vpop.f32.mrf.mxu0
  %v612 = vadd.f32 %v433, %v611
  %v613 = vpop.f32.mrf.mxu0
  %v614 = vpop.f32.mrf.mxu0
  %v615 = vadd.f32 %v438, %v614
  %v616 = vpop.f32.mrf.mxu0
  %617 = vmatprep.mubr.bf16.mxu0 0
  %618 = vmatmul.mubr.bf16.gmra.mxu0 %v487
  %v619 = vpop.f32.mrf.mxu0
  %v620 = vadd.f32 %v443, %v619
  %v621 = vpop.f32.mrf.mxu0
  %v622 = vpop.f32.mrf.mxu0
  %v623 = vadd.f32 %v448, %v622
  %v624 = vpop.f32.mrf.mxu0
  %625 = vmatprep.mubr.bf16.mxu0 0
  %626 = vmatmul.mubr.bf16.gmra.mxu0 %v490
  %v627 = vpop.f32.mrf.mxu0
  %v628 = vadd.f32 %v453, %v627
  %v629 = vpop.f32.mrf.mxu0
  %v630 = vpop.f32.mrf.mxu0
  %v631 = vadd.f32 %v458, %v630
  %v632 = vpop.f32.mrf.mxu0
  %633 = vdwg.mxu0
  %v634 = vmax.f32 %v604, 0.0
  %v635 = vmax.f32 %v607, 0.0
  %v636 = vmax.f32 %v612, 0.0
  %v637 = vmax.f32 %v615, 0.0
  %v638 = vmax.f32 %v620, 0.0
  %v639 = vmax.f32 %v623, 0.0
  %v640 = vmax.f32 %v628, 0.0
  %v641 = vmax.f32 %v631, 0.0
  %v642 = vpack.c.bf16 %v635, %v634
  %v643 = vpack.c.bf16 %v637, %v636
  %v644 = vpack.c.bf16 %v639, %v638
  %v645 = vpack.c.bf16 %v641, %v640
  %v646 = vld [vmem:[%s3] sm:$0xf]
  %v647 = vld [vmem:[%s3 + $0x4] sm:$0xf]
  %v648 = vld [vmem:[%s3 + $0x8] sm:$0xf]
  %v649 = vld [vmem:[%s3 + $0xc] sm:$0xf]
  %v650 = vld [vmem:[%s3 + $0x10] sm:$0xf]
  %v651 = vld [vmem:[%s3 + $0x14] sm:$0xf]
  %v652 = vld [vmem:[%s3 + $0x18] sm:$0xf]
  %v653 = vld [vmem:[%s3 + $0x1c] sm:$0xf]
  %v654 = vld [vmem:[%s11] sm:$0xff]
  %v655 = vld [vmem:[%s11 + $0x8] sm:$0xff]
  %v656 = vld [vmem:[%s11 + $0x10] sm:$0xff]
  %v657 = vld [vmem:[%s11 + $0x18] sm:$0xff]
  %v658 = vld [vmem:[%s11 + $0x20] sm:$0xff]
  %v659 = vld [vmem:[%s11 + $0x28] sm:$0xff]
  %v660 = vld [vmem:[%s11 + $0x30] sm:$0xff]
  %v661 = vld [vmem:[%s11 + $0x38] sm:$0xff]
  %663 = vset.pattern.permute.xlu0 0
  %664 = vperm.xlu0 %663, %v654
  %v665 = vpop.permute.xlu0 %664
  %668 = vset.pattern.permute.xlu0 0
  %669 = vperm.xlu0 %668, %v655
  %v670 = vpop.permute.xlu0 %669
  %673 = vset.pattern.permute.xlu0 0
  %674 = vperm.xlu0 %673, %v656
  %v675 = vpop.permute.xlu0 %674
  %678 = vset.pattern.permute.xlu0 0
  %679 = vperm.xlu0 %678, %v657
  %v680 = vpop.permute.xlu0 %679
  %683 = vset.pattern.permute.xlu0 0
  %684 = vperm.xlu0 %683, %v658
  %v685 = vpop.permute.xlu0 %684
  %688 = vset.pattern.permute.xlu0 0
  %689 = vperm.xlu0 %688, %v659
  %v690 = vpop.permute.xlu0 %689
  %693 = vset.pattern.permute.xlu0 0
  %694 = vperm.xlu0 %693, %v660
  %v695 = vpop.permute.xlu0 %694
  %698 = vset.pattern.permute.xlu0 0
  %699 = vperm.xlu0 %698, %v661
  %v700 = vpop.permute.xlu0 %699
  %v710 = vunpack.c.l.b16 %v646
  %v711 = vunpack.c.l.b16 %v647
  %v712 = vunpack.c.l.b16 %v648
  %v713 = vunpack.c.l.b16 %v649
  %v714 = vunpack.c.l.b16 %v650
  %v715 = vunpack.c.l.b16 %v651
  %v716 = vunpack.c.l.b16 %v652
  %v717 = vunpack.c.l.b16 %v653
  %v718 = vpack.c.b16 %v711, %v710
  %v719 = vpack.c.b16 %v713, %v712
  %v720 = vpack.c.b16 %v715, %v714
  %v721 = vpack.c.b16 %v717, %v716
  %v723 = vsel %vm237, %v718, 0
  %v726 = vsel %vm237, %v719, 0
  %v729 = vsel %vm237, %v720, 0
  %v732 = vsel %vm237, %v721, 0
  %734 = vmatprep.subr.bf16.mxu0 0
  %735 = vmatpush1.bf16.msra.mxu0 0
  %736 = vmatprep.subr.bf16.mxu0 0
  %737 = vmatpush1.bf16.msra.mxu0 0
  %738 = vmatprep.subr.bf16.mxu0 0
  %739 = vmatpush1.bf16.msra.mxu0 0
  %740 = vmatprep.subr.bf16.mxu0 0
  %741 = vmatpush1.bf16.msra.mxu0 0
  %742 = vmatprep.subr.bf16.mxu0 0
  %743 = vmatpush1.bf16.msra.mxu0 %v568
  %744 = vmatprep.subr.bf16.mxu0 0
  %745 = vmatpush1.bf16.msra.mxu0 %v567
  %746 = vmatprep.subr.bf16.mxu0 0
  %747 = vmatpush1.bf16.msra.mxu0 %v566
  %748 = vmatprep.subr.bf16.mxu0 0
  %749 = vmatpush1.bf16.msra.mxu0 %v565
  %750 = vmatprep.subr.bf16.mxu0 0
  %751 = vmatpush2.bf16.msra.mxu0 0
  %752 = vmatprep.subr.bf16.mxu0 0
  %753 = vmatpush2.bf16.msra.mxu0 0
  %754 = vmatprep.subr.bf16.mxu0 0
  %755 = vmatpush2.bf16.msra.mxu0 0
  %756 = vmatprep.subr.bf16.mxu0 0
  %757 = vmatpush2.bf16.msra.mxu0 0
  %758 = vmatprep.subr.bf16.mxu0 0
  %759 = vmatpush2.bf16.msra.mxu0 0
  %760 = vmatprep.subr.bf16.mxu0 0
  %761 = vmatpush2.bf16.msra.mxu0 0
  %762 = vmatprep.subr.bf16.mxu0 0
  %763 = vmatpush2.bf16.msra.mxu0 0
  %764 = vmatprep.subr.bf16.mxu0 0
  %765 = vmatpush2.bf16.msra.mxu0 0
  %766 = vmatprep.mubr.bf16.mxu0 0
  %767 = vmatmul.mubr.bf16.gmra.mxu0 %v723
  %v768 = vpop.f32.mrf.mxu0
  %v769 = vadd.f32 %v665, %v768
  %v770 = vpop.f32.mrf.mxu0
  %v771 = vpop.f32.mrf.mxu0
  %v772 = vadd.f32 %v670, %v771
  %v773 = vpop.f32.mrf.mxu0
  %774 = vmatprep.mubr.bf16.mxu0 0
  %775 = vmatmul.mubr.bf16.gmra.mxu0 %v726
  %v776 = vpop.f32.mrf.mxu0
  %v777 = vadd.f32 %v675, %v776
  %v778 = vpop.f32.mrf.mxu0
  %v779 = vpop.f32.mrf.mxu0
  %v780 = vadd.f32 %v680, %v779
  %v781 = vpop.f32.mrf.mxu0
  %782 = vmatprep.mubr.bf16.mxu0 0
  %783 = vmatmul.mubr.bf16.gmra.mxu0 %v729
  %v784 = vpop.f32.mrf.mxu0
  %v785 = vadd.f32 %v685, %v784
  %v786 = vpop.f32.mrf.mxu0
  %v787 = vpop.f32.mrf.mxu0
  %v788 = vadd.f32 %v690, %v787
  %v789 = vpop.f32.mrf.mxu0
  %790 = vmatprep.mubr.bf16.mxu0 0
  %791 = vmatmul.mubr.bf16.gmra.mxu0 %v732
  %v792 = vpop.f32.mrf.mxu0
  %v793 = vadd.f32 %v695, %v792
  %v794 = vpop.f32.mrf.mxu0
  %v795 = vpop.f32.mrf.mxu0
  %v796 = vadd.f32 %v700, %v795
  %v797 = vpop.f32.mrf.mxu0
  %798 = vdwg.mxu0
  %v799 = vmax.f32 %v769, 0.0
  %v800 = vmax.f32 %v772, 0.0
  %v801 = vmax.f32 %v777, 0.0
  %v802 = vmax.f32 %v780, 0.0
  %v803 = vmax.f32 %v785, 0.0
  %v804 = vmax.f32 %v788, 0.0
  %v805 = vmax.f32 %v793, 0.0
  %v806 = vmax.f32 %v796, 0.0
  %v807 = vpack.c.bf16 %v800, %v799
  %v808 = vpack.c.bf16 %v802, %v801
  %v809 = vpack.c.bf16 %v804, %v803
  %v810 = vpack.c.bf16 %v806, %v805
  %811 = vmatprep.subr.bf16.mxu0 0
  %812 = vmatpush1.bf16.msra.mxu0 0
  %813 = vmatprep.subr.bf16.mxu0 0
  %814 = vmatpush1.bf16.msra.mxu0 0
  %815 = vmatprep.subr.bf16.mxu0 0
  %816 = vmatpush1.bf16.msra.mxu0 0
  %817 = vmatprep.subr.bf16.mxu0 0
  %818 = vmatpush1.bf16.msra.mxu0 0
  %819 = vmatprep.subr.bf16.mxu0 0
  %820 = vmatpush1.bf16.msra.mxu0 %v645
  %821 = vmatprep.subr.bf16.mxu0 0
  %822 = vmatpush1.bf16.msra.mxu0 %v644
  %823 = vmatprep.subr.bf16.mxu0 0
  %824 = vmatpush1.bf16.msra.mxu0 %v643
  %825 = vmatprep.subr.bf16.mxu0 0
  %826 = vmatpush1.bf16.msra.mxu0 %v642
  %827 = vmatprep.subr.bf16.mxu0 0
  %828 = vmatpush2.bf16.msra.mxu0 0
  %829 = vmatprep.subr.bf16.mxu0 0
  %830 = vmatpush2.bf16.msra.mxu0 0
  %831 = vmatprep.subr.bf16.mxu0 0
  %832 = vmatpush2.bf16.msra.mxu0 0
  %833 = vmatprep.subr.bf16.mxu0 0
  %834 = vmatpush2.bf16.msra.mxu0 0
  %835 = vmatprep.subr.bf16.mxu0 0
  %836 = vmatpush2.bf16.msra.mxu0 0
  %837 = vmatprep.subr.bf16.mxu0 0
  %838 = vmatpush2.bf16.msra.mxu0 0
  %839 = vmatprep.subr.bf16.mxu0 0
  %840 = vmatpush2.bf16.msra.mxu0 0
  %841 = vmatprep.subr.bf16.mxu0 0
  %842 = vmatpush2.bf16.msra.mxu0 0
  %843 = vmatprep.mubr.bf16.mxu0 0
  %844 = vmatmul.mubr.bf16.gmra.mxu0 %v723
  %v845 = vpop.f32.mrf.mxu0
  %v846 = vadd.f32 %v665, %v845
  %v847 = vpop.f32.mrf.mxu0
  %v848 = vpop.f32.mrf.mxu0
  %v849 = vadd.f32 %v670, %v848
  %v850 = vpop.f32.mrf.mxu0
  %851 = vmatprep.mubr.bf16.mxu0 0
  %852 = vmatmul.mubr.bf16.gmra.mxu0 %v726
  %v853 = vpop.f32.mrf.mxu0
  %v854 = vadd.f32 %v675, %v853
  %v855 = vpop.f32.mrf.mxu0
  %v856 = vpop.f32.mrf.mxu0
  %v857 = vadd.f32 %v680, %v856
  %v858 = vpop.f32.mrf.mxu0
  %859 = vmatprep.mubr.bf16.mxu0 0
  %860 = vmatmul.mubr.bf16.gmra.mxu0 %v729
  %v861 = vpop.f32.mrf.mxu0
  %v862 = vadd.f32 %v685, %v861
  %v863 = vpop.f32.mrf.mxu0
  %v864 = vpop.f32.mrf.mxu0
  %v865 = vadd.f32 %v690, %v864
  %v866 = vpop.f32.mrf.mxu0
  %867 = vmatprep.mubr.bf16.mxu0 0
  %868 = vmatmul.mubr.bf16.gmra.mxu0 %v732
  %v869 = vpop.f32.mrf.mxu0
  %v870 = vadd.f32 %v695, %v869
  %v871 = vpop.f32.mrf.mxu0
  %v872 = vpop.f32.mrf.mxu0
  %v873 = vadd.f32 %v700, %v872
  %v874 = vpop.f32.mrf.mxu0
  %875 = vdwg.mxu0
  %v876 = vmax.f32 %v846, 0.0
  %v877 = vmax.f32 %v849, 0.0
  %v878 = vmax.f32 %v854, 0.0
  %v879 = vmax.f32 %v857, 0.0
  %v880 = vmax.f32 %v862, 0.0
  %v881 = vmax.f32 %v865, 0.0
  %v882 = vmax.f32 %v870, 0.0
  %v883 = vmax.f32 %v873, 0.0
  %v884 = vpack.c.bf16 %v877, %v876
  %v885 = vpack.c.bf16 %v879, %v878
  %v886 = vpack.c.bf16 %v881, %v880
  %v887 = vpack.c.bf16 %v883, %v882
  %v888 = vld [vmem:[%s4] sm:$0xf]
  %v889 = vld [vmem:[%s4 + $0x4] sm:$0xf]
  %v890 = vld [vmem:[%s4 + $0x8] sm:$0xf]
  %v891 = vld [vmem:[%s4 + $0xc] sm:$0xf]
  %v892 = vld [vmem:[%s12] sm:$0xff]
  %v893 = vld [vmem:[%s12 + $0x8] sm:$0xff]
  %v894 = vld [vmem:[%s12 + $0x10] sm:$0xff]
  %v895 = vld [vmem:[%s12 + $0x18] sm:$0xff]
  %897 = vset.pattern.permute.xlu0 0
  %898 = vperm.xlu0 %897, %v892
  %v899 = vpop.permute.xlu0 %898
  %902 = vset.pattern.permute.xlu0 0
  %903 = vperm.xlu0 %902, %v893
  %v904 = vpop.permute.xlu0 %903
  %907 = vset.pattern.permute.xlu0 0
  %908 = vperm.xlu0 %907, %v894
  %v909 = vpop.permute.xlu0 %908
  %912 = vset.pattern.permute.xlu0 0
  %913 = vperm.xlu0 %912, %v895
  %v914 = vpop.permute.xlu0 %913
  %v920 = vunpack.c.l.b16 %v888
  %v921 = vunpack.c.l.b16 %v889
  %v922 = vunpack.c.l.b16 %v890
  %v923 = vunpack.c.l.b16 %v891
  %v924 = vpack.c.b16 %v921, %v920
  %v925 = vpack.c.b16 %v923, %v922
  %v927 = vsel %vm237, %v924, 0
  %v930 = vsel %vm237, %v925, 0
  %932 = vmatprep.subr.bf16.mxu0 0
  %933 = vmatpush1.bf16.msra.mxu0 0
  %934 = vmatprep.subr.bf16.mxu0 0
  %935 = vmatpush1.bf16.msra.mxu0 0
  %936 = vmatprep.subr.bf16.mxu0 0
  %937 = vmatpush1.bf16.msra.mxu0 0
  %938 = vmatprep.subr.bf16.mxu0 0
  %939 = vmatpush1.bf16.msra.mxu0 0
  %940 = vmatprep.subr.bf16.mxu0 0
  %941 = vmatpush1.bf16.msra.mxu0 %v810
  %942 = vmatprep.subr.bf16.mxu0 0
  %943 = vmatpush1.bf16.msra.mxu0 %v809
  %944 = vmatprep.subr.bf16.mxu0 0
  %945 = vmatpush1.bf16.msra.mxu0 %v808
  %946 = vmatprep.subr.bf16.mxu0 0
  %947 = vmatpush1.bf16.msra.mxu0 %v807
  %948 = vmatprep.subr.bf16.mxu0 0
  %949 = vmatpush2.bf16.msra.mxu0 0
  %950 = vmatprep.subr.bf16.mxu0 0
  %951 = vmatpush2.bf16.msra.mxu0 0
  %952 = vmatprep.subr.bf16.mxu0 0
  %953 = vmatpush2.bf16.msra.mxu0 0
  %954 = vmatprep.subr.bf16.mxu0 0
  %955 = vmatpush2.bf16.msra.mxu0 0
  %956 = vmatprep.subr.bf16.mxu0 0
  %957 = vmatpush2.bf16.msra.mxu0 0
  %958 = vmatprep.subr.bf16.mxu0 0
  %959 = vmatpush2.bf16.msra.mxu0 0
  %960 = vmatprep.subr.bf16.mxu0 0
  %961 = vmatpush2.bf16.msra.mxu0 0
  %962 = vmatprep.subr.bf16.mxu0 0
  %963 = vmatpush2.bf16.msra.mxu0 0
  %964 = vmatprep.mubr.bf16.mxu0 0
  %965 = vmatmul.mubr.bf16.gmra.mxu0 %v927
  %v966 = vpop.f32.mrf.mxu0
  %v967 = vadd.f32 %v899, %v966
  %v968 = vpop.f32.mrf.mxu0
  %v969 = vpop.f32.mrf.mxu0
  %v970 = vadd.f32 %v904, %v969
  %v971 = vpop.f32.mrf.mxu0
  %972 = vmatprep.mubr.bf16.mxu0 0
  %973 = vmatmul.mubr.bf16.gmra.mxu0 %v930
  %v974 = vpop.f32.mrf.mxu0
  %v975 = vadd.f32 %v909, %v974
  %v976 = vpop.f32.mrf.mxu0
  %v977 = vpop.f32.mrf.mxu0
  %v978 = vadd.f32 %v914, %v977
  %v979 = vpop.f32.mrf.mxu0
  %980 = vdwg.mxu0
  %v981 = vmax.f32 %v967, 0.0
  %v982 = vmax.f32 %v970, 0.0
  %v983 = vmax.f32 %v975, 0.0
  %v984 = vmax.f32 %v978, 0.0
  %v985 = vpack.c.bf16 %v982, %v981
  %v986 = vpack.c.bf16 %v984, %v983
  %987 = vmatprep.subr.bf16.mxu0 0
  %988 = vmatpush1.bf16.msra.mxu0 0
  %989 = vmatprep.subr.bf16.mxu0 0
  %990 = vmatpush1.bf16.msra.mxu0 0
  %991 = vmatprep.subr.bf16.mxu0 0
  %992 = vmatpush1.bf16.msra.mxu0 0
  %993 = vmatprep.subr.bf16.mxu0 0
  %994 = vmatpush1.bf16.msra.mxu0 0
  %995 = vmatprep.subr.bf16.mxu0 0
  %996 = vmatpush1.bf16.msra.mxu0 %v887
  %997 = vmatprep.subr.bf16.mxu0 0
  %998 = vmatpush1.bf16.msra.mxu0 %v886
  %999 = vmatprep.subr.bf16.mxu0 0
  %1000 = vmatpush1.bf16.msra.mxu0 %v885
  %1001 = vmatprep.subr.bf16.mxu0 0
  %1002 = vmatpush1.bf16.msra.mxu0 %v884
  %1003 = vmatprep.subr.bf16.mxu0 0
  %1004 = vmatpush2.bf16.msra.mxu0 0
  %1005 = vmatprep.subr.bf16.mxu0 0
  %1006 = vmatpush2.bf16.msra.mxu0 0
  %1007 = vmatprep.subr.bf16.mxu0 0
  %1008 = vmatpush2.bf16.msra.mxu0 0
  %1009 = vmatprep.subr.bf16.mxu0 0
  %1010 = vmatpush2.bf16.msra.mxu0 0
  %1011 = vmatprep.subr.bf16.mxu0 0
  %1012 = vmatpush2.bf16.msra.mxu0 0
  %1013 = vmatprep.subr.bf16.mxu0 0
  %1014 = vmatpush2.bf16.msra.mxu0 0
  %1015 = vmatprep.subr.bf16.mxu0 0
  %1016 = vmatpush2.bf16.msra.mxu0 0
  %1017 = vmatprep.subr.bf16.mxu0 0
  %1018 = vmatpush2.bf16.msra.mxu0 0
  %1019 = vmatprep.mubr.bf16.mxu0 0
  %1020 = vmatmul.mubr.bf16.gmra.mxu0 %v927
  %v1021 = vpop.f32.mrf.mxu0
  %v1022 = vadd.f32 %v899, %v1021
  %v1023 = vpop.f32.mrf.mxu0
  %v1024 = vpop.f32.mrf.mxu0
  %v1025 = vadd.f32 %v904, %v1024
  %v1026 = vpop.f32.mrf.mxu0
  %1027 = vmatprep.mubr.bf16.mxu0 0
  %1028 = vmatmul.mubr.bf16.gmra.mxu0 %v930
  %v1029 = vpop.f32.mrf.mxu0
  %v1030 = vadd.f32 %v909, %v1029
  %v1031 = vpop.f32.mrf.mxu0
  %v1032 = vpop.f32.mrf.mxu0
  %v1033 = vadd.f32 %v914, %v1032
  %v1034 = vpop.f32.mrf.mxu0
  %1035 = vdwg.mxu0
  %v1036 = vmax.f32 %v1022, 0.0
  %v1037 = vmax.f32 %v1025, 0.0
  %v1038 = vmax.f32 %v1030, 0.0
  %v1039 = vmax.f32 %v1033, 0.0
  %v1040 = vpack.c.bf16 %v1037, %v1036
  %v1041 = vpack.c.bf16 %v1039, %v1038
  %v1042 = vld [vmem:[%s5] sm:$0xf]
  %v1043 = vld [vmem:[%s5 + $0x4] sm:$0xf]
  %v1044 = vld [vmem:[%s5 + $0x8] sm:$0xf]
  %v1045 = vld [vmem:[%s5 + $0xc] sm:$0xf]
  %v1046 = vld [vmem:[%s13] sm:$0xff]
  %v1047 = vld [vmem:[%s13 + $0x8] sm:$0xff]
  %v1048 = vld [vmem:[%s13 + $0x10] sm:$0xff]
  %v1049 = vld [vmem:[%s13 + $0x18] sm:$0xff]
  %1051 = vset.pattern.permute.xlu0 0
  %1052 = vperm.xlu0 %1051, %v1046
  %v1053 = vpop.permute.xlu0 %1052
  %1056 = vset.pattern.permute.xlu0 0
  %1057 = vperm.xlu0 %1056, %v1047
  %v1058 = vpop.permute.xlu0 %1057
  %1061 = vset.pattern.permute.xlu0 0
  %1062 = vperm.xlu0 %1061, %v1048
  %v1063 = vpop.permute.xlu0 %1062
  %1066 = vset.pattern.permute.xlu0 0
  %1067 = vperm.xlu0 %1066, %v1049
  %v1068 = vpop.permute.xlu0 %1067
  %v1074 = vunpack.c.l.b16 %v1042
  %v1075 = vunpack.c.l.b16 %v1043
  %v1076 = vunpack.c.l.b16 %v1044
  %v1077 = vunpack.c.l.b16 %v1045
  %v1078 = vpack.c.b16 %v1075, %v1074
  %v1079 = vpack.c.b16 %v1077, %v1076
  %vm1080 = vcmask 261120
  %v1082 = vsel %vm1080, %v1078, 0
  %v1085 = vsel %vm1080, %v1079, 0
  %1087 = vmatprep.subr.bf16.mxu0 0
  %1088 = vmatpush1.bf16.msra.mxu0 0
  %1089 = vmatprep.subr.bf16.mxu0 0
  %1090 = vmatpush1.bf16.msra.mxu0 0
  %1091 = vmatprep.subr.bf16.mxu0 0
  %1092 = vmatpush1.bf16.msra.mxu0 0
  %1093 = vmatprep.subr.bf16.mxu0 0
  %1094 = vmatpush1.bf16.msra.mxu0 0
  %1095 = vmatprep.subr.bf16.mxu0 0
  %1096 = vmatpush1.bf16.msra.mxu0 0
  %1097 = vmatprep.subr.bf16.mxu0 0
  %1098 = vmatpush1.bf16.msra.mxu0 0
  %1099 = vmatprep.subr.bf16.mxu0 0
  %1100 = vmatpush1.bf16.msra.mxu0 %v986
  %1101 = vmatprep.subr.bf16.mxu0 0
  %1102 = vmatpush1.bf16.msra.mxu0 %v985
  %1103 = vmatprep.subr.bf16.mxu0 0
  %1104 = vmatpush2.bf16.msra.mxu0 0
  %1105 = vmatprep.subr.bf16.mxu0 0
  %1106 = vmatpush2.bf16.msra.mxu0 0
  %1107 = vmatprep.subr.bf16.mxu0 0
  %1108 = vmatpush2.bf16.msra.mxu0 0
  %1109 = vmatprep.subr.bf16.mxu0 0
  %1110 = vmatpush2.bf16.msra.mxu0 0
  %1111 = vmatprep.subr.bf16.mxu0 0
  %1112 = vmatpush2.bf16.msra.mxu0 0
  %1113 = vmatprep.subr.bf16.mxu0 0
  %1114 = vmatpush2.bf16.msra.mxu0 0
  %1115 = vmatprep.subr.bf16.mxu0 0
  %1116 = vmatpush2.bf16.msra.mxu0 0
  %1117 = vmatprep.subr.bf16.mxu0 0
  %1118 = vmatpush2.bf16.msra.mxu0 0
  %1119 = vmatprep.mubr.bf16.mxu0 0
  %1120 = vmatmul.mubr.bf16.gmra.mxu0 %v1082
  %v1121 = vpop.f32.mrf.mxu0
  %v1122 = vadd.f32 %v1053, %v1121
  %v1123 = vpop.f32.mrf.mxu0
  %v1124 = vpop.f32.mrf.mxu0
  %v1125 = vadd.f32 %v1058, %v1124
  %v1126 = vpop.f32.mrf.mxu0
  %1127 = vmatprep.mubr.bf16.mxu0 0
  %1128 = vmatmul.mubr.bf16.gmra.mxu0 %v1085
  %v1129 = vpop.f32.mrf.mxu0
  %v1130 = vadd.f32 %v1063, %v1129
  %v1131 = vpop.f32.mrf.mxu0
  %v1132 = vpop.f32.mrf.mxu0
  %v1133 = vadd.f32 %v1068, %v1132
  %v1134 = vpop.f32.mrf.mxu0
  %1135 = vdwg.mxu0
  %v1136 = vmax.f32 %v1122, 0.0
  %v1137 = vmax.f32 %v1125, 0.0
  %v1138 = vmax.f32 %v1130, 0.0
  %v1139 = vmax.f32 %v1133, 0.0
  %v1140 = vpack.c.bf16 %v1137, %v1136
  %v1141 = vpack.c.bf16 %v1139, %v1138
  %1142 = vmatprep.subr.bf16.mxu0 0
  %1143 = vmatpush1.bf16.msra.mxu0 0
  %1144 = vmatprep.subr.bf16.mxu0 0
  %1145 = vmatpush1.bf16.msra.mxu0 0
  %1146 = vmatprep.subr.bf16.mxu0 0
  %1147 = vmatpush1.bf16.msra.mxu0 0
  %1148 = vmatprep.subr.bf16.mxu0 0
  %1149 = vmatpush1.bf16.msra.mxu0 0
  %1150 = vmatprep.subr.bf16.mxu0 0
  %1151 = vmatpush1.bf16.msra.mxu0 0
  %1152 = vmatprep.subr.bf16.mxu0 0
  %1153 = vmatpush1.bf16.msra.mxu0 0
  %1154 = vmatprep.subr.bf16.mxu0 0
  %1155 = vmatpush1.bf16.msra.mxu0 %v1041
  %1156 = vmatprep.subr.bf16.mxu0 0
  %1157 = vmatpush1.bf16.msra.mxu0 %v1040
  %1158 = vmatprep.subr.bf16.mxu0 0
  %1159 = vmatpush2.bf16.msra.mxu0 0
  %1160 = vmatprep.subr.bf16.mxu0 0
  %1161 = vmatpush2.bf16.msra.mxu0 0
  %1162 = vmatprep.subr.bf16.mxu0 0
  %1163 = vmatpush2.bf16.msra.mxu0 0
  %1164 = vmatprep.subr.bf16.mxu0 0
  %1165 = vmatpush2.bf16.msra.mxu0 0
  %1166 = vmatprep.subr.bf16.mxu0 0
  %1167 = vmatpush2.bf16.msra.mxu0 0
  %1168 = vmatprep.subr.bf16.mxu0 0
  %1169 = vmatpush2.bf16.msra.mxu0 0
  %1170 = vmatprep.subr.bf16.mxu0 0
  %1171 = vmatpush2.bf16.msra.mxu0 0
  %1172 = vmatprep.subr.bf16.mxu0 0
  %1173 = vmatpush2.bf16.msra.mxu0 0
  %1174 = vmatprep.mubr.bf16.mxu0 0
  %1175 = vmatmul.mubr.bf16.gmra.mxu0 %v1082
  %v1176 = vpop.f32.mrf.mxu0
  %v1177 = vadd.f32 %v1053, %v1176
  %v1178 = vpop.f32.mrf.mxu0
  %v1179 = vpop.f32.mrf.mxu0
  %v1180 = vadd.f32 %v1058, %v1179
  %v1181 = vpop.f32.mrf.mxu0
  %1182 = vmatprep.mubr.bf16.mxu0 0
  %1183 = vmatmul.mubr.bf16.gmra.mxu0 %v1085
  %v1184 = vpop.f32.mrf.mxu0
  %v1185 = vadd.f32 %v1063, %v1184
  %v1186 = vpop.f32.mrf.mxu0
  %v1187 = vpop.f32.mrf.mxu0
  %v1188 = vadd.f32 %v1068, %v1187
  %v1189 = vpop.f32.mrf.mxu0
  %1190 = vdwg.mxu0
  %v1191 = vmax.f32 %v1177, 0.0
  %v1192 = vmax.f32 %v1180, 0.0
  %v1193 = vmax.f32 %v1185, 0.0
  %v1194 = vmax.f32 %v1188, 0.0
  %v1195 = vpack.c.bf16 %v1192, %v1191
  %v1196 = vpack.c.bf16 %v1194, %v1193
  %v1197 = vld [vmem:[%s6] sm:$0xf]
  %v1198 = vld [vmem:[%s6 + $0x4] sm:$0xf]
  %v1199 = vld [vmem:[%s14] sm:$0xff]
  %v1200 = vld [vmem:[%s14 + $0x8] sm:$0xff]
  %1202 = vset.pattern.permute.xlu0 0
  %1203 = vperm.xlu0 %1202, %v1199
  %v1204 = vpop.permute.xlu0 %1203
  %1207 = vset.pattern.permute.xlu0 0
  %1208 = vperm.xlu0 %1207, %v1200
  %v1209 = vpop.permute.xlu0 %1208
  %v1213 = vunpack.c.l.b16 %v1197
  %v1214 = vunpack.c.l.b16 %v1198
  %v1215 = vpack.c.b16 %v1214, %v1213
  %v1217 = vsel %vm1080, %v1215, 0
  %1219 = vmatprep.subr.bf16.mxu0 0
  %1220 = vmatpush1.bf16.msra.mxu0 0
  %1221 = vmatprep.subr.bf16.mxu0 0
  %1222 = vmatpush1.bf16.msra.mxu0 0
  %1223 = vmatprep.subr.bf16.mxu0 0
  %1224 = vmatpush1.bf16.msra.mxu0 0
  %1225 = vmatprep.subr.bf16.mxu0 0
  %1226 = vmatpush1.bf16.msra.mxu0 0
  %1227 = vmatprep.subr.bf16.mxu0 0
  %1228 = vmatpush1.bf16.msra.mxu0 0
  %1229 = vmatprep.subr.bf16.mxu0 0
  %1230 = vmatpush1.bf16.msra.mxu0 0
  %1231 = vmatprep.subr.bf16.mxu0 0
  %1232 = vmatpush1.bf16.msra.mxu0 %v1141
  %1233 = vmatprep.subr.bf16.mxu0 0
  %1234 = vmatpush1.bf16.msra.mxu0 %v1140
  %1235 = vmatprep.subr.bf16.mxu0 0
  %1236 = vmatpush2.bf16.msra.mxu0 0
  %1237 = vmatprep.subr.bf16.mxu0 0
  %1238 = vmatpush2.bf16.msra.mxu0 0
  %1239 = vmatprep.subr.bf16.mxu0 0
  %1240 = vmatpush2.bf16.msra.mxu0 0
  %1241 = vmatprep.subr.bf16.mxu0 0
  %1242 = vmatpush2.bf16.msra.mxu0 0
  %1243 = vmatprep.subr.bf16.mxu0 0
  %1244 = vmatpush2.bf16.msra.mxu0 0
  %1245 = vmatprep.subr.bf16.mxu0 0
  %1246 = vmatpush2.bf16.msra.mxu0 0
  %1247 = vmatprep.subr.bf16.mxu0 0
  %1248 = vmatpush2.bf16.msra.mxu0 0
  %1249 = vmatprep.subr.bf16.mxu0 0
  %1250 = vmatpush2.bf16.msra.mxu0 0
  %1251 = vmatprep.mubr.bf16.mxu0 0
  %1252 = vmatmul.mubr.bf16.gmra.mxu0 %v1217
  %v1253 = vpop.f32.mrf.mxu0
  %v1254 = vadd.f32 %v1204, %v1253
  %v1255 = vpop.f32.mrf.mxu0
  %v1256 = vpop.f32.mrf.mxu0
  %v1257 = vadd.f32 %v1209, %v1256
  %v1258 = vpop.f32.mrf.mxu0
  %1259 = vdwg.mxu0
  %v1260 = vmax.f32 %v1254, 0.0
  %v1261 = vmax.f32 %v1257, 0.0
  %v1262 = vpack.c.bf16 %v1261, %v1260
  %1263 = vmatprep.subr.bf16.mxu0 0
  %1264 = vmatpush1.bf16.msra.mxu0 0
  %1265 = vmatprep.subr.bf16.mxu0 0
  %1266 = vmatpush1.bf16.msra.mxu0 0
  %1267 = vmatprep.subr.bf16.mxu0 0
  %1268 = vmatpush1.bf16.msra.mxu0 0
  %1269 = vmatprep.subr.bf16.mxu0 0
  %1270 = vmatpush1.bf16.msra.mxu0 0
  %1271 = vmatprep.subr.bf16.mxu0 0
  %1272 = vmatpush1.bf16.msra.mxu0 0
  %1273 = vmatprep.subr.bf16.mxu0 0
  %1274 = vmatpush1.bf16.msra.mxu0 0
  %1275 = vmatprep.subr.bf16.mxu0 0
  %1276 = vmatpush1.bf16.msra.mxu0 %v1196
  %1277 = vmatprep.subr.bf16.mxu0 0
  %1278 = vmatpush1.bf16.msra.mxu0 %v1195
  %1279 = vmatprep.subr.bf16.mxu0 0
  %1280 = vmatpush2.bf16.msra.mxu0 0
  %1281 = vmatprep.subr.bf16.mxu0 0
  %1282 = vmatpush2.bf16.msra.mxu0 0
  %1283 = vmatprep.subr.bf16.mxu0 0
  %1284 = vmatpush2.bf16.msra.mxu0 0
  %1285 = vmatprep.subr.bf16.mxu0 0
  %1286 = vmatpush2.bf16.msra.mxu0 0
  %1287 = vmatprep.subr.bf16.mxu0 0
  %1288 = vmatpush2.bf16.msra.mxu0 0
  %1289 = vmatprep.subr.bf16.mxu0 0
  %1290 = vmatpush2.bf16.msra.mxu0 0
  %1291 = vmatprep.subr.bf16.mxu0 0
  %1292 = vmatpush2.bf16.msra.mxu0 0
  %1293 = vmatprep.subr.bf16.mxu0 0
  %1294 = vmatpush2.bf16.msra.mxu0 0
  %1295 = vmatprep.mubr.bf16.mxu0 0
  %1296 = vmatmul.mubr.bf16.gmra.mxu0 %v1217
  %v1297 = vpop.f32.mrf.mxu0
  %v1298 = vadd.f32 %v1204, %v1297
  %v1299 = vpop.f32.mrf.mxu0
  %v1300 = vpop.f32.mrf.mxu0
  %v1301 = vadd.f32 %v1209, %v1300
  %v1302 = vpop.f32.mrf.mxu0
  %1303 = vdwg.mxu0
  %v1304 = vmax.f32 %v1298, 0.0
  %v1305 = vmax.f32 %v1301, 0.0
  %v1306 = vpack.c.bf16 %v1305, %v1304
  %v1307 = vld [vmem:[%s7] sm:$0xf]
  %v1308 = vld [vmem:[%s7 + $0x4] sm:$0xf]
  %v1309 = vld [vmem:[%s15] sm:$0xff]
  %v1310 = vld [vmem:[%s15 + $0x8] sm:$0xff]
  %1312 = vset.pattern.permute.xlu0 0
  %1313 = vperm.xlu0 %1312, %v1309
  %v1314 = vpop.permute.xlu0 %1313
  %1317 = vset.pattern.permute.xlu0 0
  %1318 = vperm.xlu0 %1317, %v1310
  %v1319 = vpop.permute.xlu0 %1318
  %v1323 = vunpack.c.l.b16 %v1307
  %v1324 = vunpack.c.l.b16 %v1308
  %v1325 = vpack.c.b16 %v1324, %v1323
  %vm1326 = vcmask 130048
  %v1328 = vsel %vm1326, %v1325, 0
  %1330 = vmatprep.subr.bf16.mxu0 0
  %1331 = vmatpush1.bf16.msra.mxu0 0
  %1332 = vmatprep.subr.bf16.mxu0 0
  %1333 = vmatpush1.bf16.msra.mxu0 0
  %1334 = vmatprep.subr.bf16.mxu0 0
  %1335 = vmatpush1.bf16.msra.mxu0 0
  %1336 = vmatprep.subr.bf16.mxu0 0
  %1337 = vmatpush1.bf16.msra.mxu0 0
  %1338 = vmatprep.subr.bf16.mxu0 0
  %1339 = vmatpush1.bf16.msra.mxu0 0
  %1340 = vmatprep.subr.bf16.mxu0 0
  %1341 = vmatpush1.bf16.msra.mxu0 0
  %1342 = vmatprep.subr.bf16.mxu0 0
  %1343 = vmatpush1.bf16.msra.mxu0 0
  %1344 = vmatprep.subr.bf16.mxu0 0
  %1345 = vmatpush1.bf16.msra.mxu0 %v1262
  %1346 = vmatprep.subr.bf16.mxu0 0
  %1347 = vmatpush2.bf16.msra.mxu0 0
  %1348 = vmatprep.subr.bf16.mxu0 0
  %1349 = vmatpush2.bf16.msra.mxu0 0
  %1350 = vmatprep.subr.bf16.mxu0 0
  %1351 = vmatpush2.bf16.msra.mxu0 0
  %1352 = vmatprep.subr.bf16.mxu0 0
  %1353 = vmatpush2.bf16.msra.mxu0 0
  %1354 = vmatprep.subr.bf16.mxu0 0
  %1355 = vmatpush2.bf16.msra.mxu0 0
  %1356 = vmatprep.subr.bf16.mxu0 0
  %1357 = vmatpush2.bf16.msra.mxu0 0
  %1358 = vmatprep.subr.bf16.mxu0 0
  %1359 = vmatpush2.bf16.msra.mxu0 0
  %1360 = vmatprep.subr.bf16.mxu0 0
  %1361 = vmatpush2.bf16.msra.mxu0 0
  %1362 = vmatprep.mubr.bf16.mxu0 0
  %1363 = vmatmul.mubr.bf16.gmra.mxu0 %v1328
  %v1364 = vpop.f32.mrf.mxu0
  %v1365 = vadd.f32 %v1314, %v1364
  %v1366 = vpop.f32.mrf.mxu0
  %v1367 = vpop.f32.mrf.mxu0
  %v1368 = vadd.f32 %v1319, %v1367
  %v1369 = vpop.f32.mrf.mxu0
  %1370 = vdwg.mxu0
  %v1371 = vmax.f32 %v1365, 0.0
  %v1372 = vmax.f32 %v1368, 0.0
  %v1373 = vpack.c.bf16 %v1372, %v1371
  %1374 = vmatprep.subr.bf16.mxu0 0
  %1375 = vmatpush1.bf16.msra.mxu0 0
  %1376 = vmatprep.subr.bf16.mxu0 0
  %1377 = vmatpush1.bf16.msra.mxu0 0
  %1378 = vmatprep.subr.bf16.mxu0 0
  %1379 = vmatpush1.bf16.msra.mxu0 0
  %1380 = vmatprep.subr.bf16.mxu0 0
  %1381 = vmatpush1.bf16.msra.mxu0 0
  %1382 = vmatprep.subr.bf16.mxu0 0
  %1383 = vmatpush1.bf16.msra.mxu0 0
  %1384 = vmatprep.subr.bf16.mxu0 0
  %1385 = vmatpush1.bf16.msra.mxu0 0
  %1386 = vmatprep.subr.bf16.mxu0 0
  %1387 = vmatpush1.bf16.msra.mxu0 0
  %1388 = vmatprep.subr.bf16.mxu0 0
  %1389 = vmatpush1.bf16.msra.mxu0 %v1306
  %1390 = vmatprep.subr.bf16.mxu0 0
  %1391 = vmatpush2.bf16.msra.mxu0 0
  %1392 = vmatprep.subr.bf16.mxu0 0
  %1393 = vmatpush2.bf16.msra.mxu0 0
  %1394 = vmatprep.subr.bf16.mxu0 0
  %1395 = vmatpush2.bf16.msra.mxu0 0
  %1396 = vmatprep.subr.bf16.mxu0 0
  %1397 = vmatpush2.bf16.msra.mxu0 0
  %1398 = vmatprep.subr.bf16.mxu0 0
  %1399 = vmatpush2.bf16.msra.mxu0 0
  %1400 = vmatprep.subr.bf16.mxu0 0
  %1401 = vmatpush2.bf16.msra.mxu0 0
  %1402 = vmatprep.subr.bf16.mxu0 0
  %1403 = vmatpush2.bf16.msra.mxu0 0
  %1404 = vmatprep.subr.bf16.mxu0 0
  %1405 = vmatpush2.bf16.msra.mxu0 0
  %1406 = vmatprep.mubr.bf16.mxu0 0
  %1407 = vmatmul.mubr.bf16.gmra.mxu0 %v1328
  %v1408 = vpop.f32.mrf.mxu0
  %v1409 = vadd.f32 %v1314, %v1408
  %v1410 = vpop.f32.mrf.mxu0
  %v1411 = vpop.f32.mrf.mxu0
  %v1412 = vadd.f32 %v1319, %v1411
  %v1413 = vpop.f32.mrf.mxu0
  %1414 = vdwg.mxu0
  %v1415 = vmax.f32 %v1409, 0.0
  %v1416 = vmax.f32 %v1412, 0.0
  %v1417 = vpack.c.bf16 %v1416, %v1415
  %v1418 = vld [vmem:[%s8] sm:$0xf]
  %v1419 = vld [vmem:[%s16] sm:$0xff]
  %1421 = vset.pattern.permute.xlu0 0
  %1422 = vperm.xlu0 %1421, %v1419
  %v1423 = vpop.permute.xlu0 %1422
  %v1426 = vsel %vm1326, %v1418, 0
  %1428 = vmatprep.subr.bf16.mxu0 0
  %1429 = vmatpush1.bf16.msra.mxu0 0
  %1430 = vmatprep.subr.bf16.mxu0 0
  %1431 = vmatpush1.bf16.msra.mxu0 0
  %1432 = vmatprep.subr.bf16.mxu0 0
  %1433 = vmatpush1.bf16.msra.mxu0 0
  %1434 = vmatprep.subr.bf16.mxu0 0
  %1435 = vmatpush1.bf16.msra.mxu0 0
  %1436 = vmatprep.subr.bf16.mxu0 0
  %1437 = vmatpush1.bf16.msra.mxu0 0
  %1438 = vmatprep.subr.bf16.mxu0 0
  %1439 = vmatpush1.bf16.msra.mxu0 0
  %1440 = vmatprep.subr.bf16.mxu0 0
  %1441 = vmatpush1.bf16.msra.mxu0 0
  %1442 = vmatprep.subr.bf16.mxu0 0
  %1443 = vmatpush1.bf16.msra.mxu0 %v1373
  %1444 = vmatprep.subr.bf16.mxu0 0
  %1445 = vmatpush2.bf16.msra.mxu0 0
  %1446 = vmatprep.subr.bf16.mxu0 0
  %1447 = vmatpush2.bf16.msra.mxu0 0
  %1448 = vmatprep.subr.bf16.mxu0 0
  %1449 = vmatpush2.bf16.msra.mxu0 0
  %1450 = vmatprep.subr.bf16.mxu0 0
  %1451 = vmatpush2.bf16.msra.mxu0 0
  %1452 = vmatprep.subr.bf16.mxu0 0
  %1453 = vmatpush2.bf16.msra.mxu0 0
  %1454 = vmatprep.subr.bf16.mxu0 0
  %1455 = vmatpush2.bf16.msra.mxu0 0
  %1456 = vmatprep.subr.bf16.mxu0 0
  %1457 = vmatpush2.bf16.msra.mxu0 0
  %1458 = vmatprep.subr.bf16.mxu0 0
  %1459 = vmatpush2.bf16.msra.mxu0 0
  %1460 = vmatprep.mubr.bf16.mxu0 0
  %1461 = vmatmul.mubr.bf16.gmra.mxu0 %v1426
  %v1462 = vpop.f32.mrf.mxu0
  %v1463 = vadd.f32 %v1423, %v1462
  %v1464 = vpop.f32.mrf.mxu0
  %v1465 = vpop.f32.mrf.mxu0
  %v1466 = vpop.f32.mrf.mxu0
  %1467 = vdwg.mxu0
  %1468 = vst [vmem:[%s17] sm:$0xff] %v1463
  %1469 = vmatprep.subr.bf16.mxu0 0
  %1470 = vmatpush1.bf16.msra.mxu0 0
  %1471 = vmatprep.subr.bf16.mxu0 0
  %1472 = vmatpush1.bf16.msra.mxu0 0
  %1473 = vmatprep.subr.bf16.mxu0 0
  %1474 = vmatpush1.bf16.msra.mxu0 0
  %1475 = vmatprep.subr.bf16.mxu0 0
  %1476 = vmatpush1.bf16.msra.mxu0 0
  %1477 = vmatprep.subr.bf16.mxu0 0
  %1478 = vmatpush1.bf16.msra.mxu0 0
  %1479 = vmatprep.subr.bf16.mxu0 0
  %1480 = vmatpush1.bf16.msra.mxu0 0
  %1481 = vmatprep.subr.bf16.mxu0 0
  %1482 = vmatpush1.bf16.msra.mxu0 0
  %1483 = vmatprep.subr.bf16.mxu0 0
  %1484 = vmatpush1.bf16.msra.mxu0 %v1417
  %1485 = vmatprep.subr.bf16.mxu0 0
  %1486 = vmatpush2.bf16.msra.mxu0 0
  %1487 = vmatprep.subr.bf16.mxu0 0
  %1488 = vmatpush2.bf16.msra.mxu0 0
  %1489 = vmatprep.subr.bf16.mxu0 0
  %1490 = vmatpush2.bf16.msra.mxu0 0
  %1491 = vmatprep.subr.bf16.mxu0 0
  %1492 = vmatpush2.bf16.msra.mxu0 0
  %1493 = vmatprep.subr.bf16.mxu0 0
  %1494 = vmatpush2.bf16.msra.mxu0 0
  %1495 = vmatprep.subr.bf16.mxu0 0
  %1496 = vmatpush2.bf16.msra.mxu0 0
  %1497 = vmatprep.subr.bf16.mxu0 0
  %1498 = vmatpush2.bf16.msra.mxu0 0
  %1499 = vmatprep.subr.bf16.mxu0 0
  %1500 = vmatpush2.bf16.msra.mxu0 0
  %1501 = vmatprep.mubr.bf16.mxu0 0
  %1502 = vmatmul.mubr.bf16.gmra.mxu0 %v1426
  %v1503 = vpop.f32.mrf.mxu0
  %v1504 = vadd.f32 %v1423, %v1503
  %v1505 = vpop.f32.mrf.mxu0
  %v1506 = vpop.f32.mrf.mxu0
  %v1507 = vpop.f32.mrf.mxu0
  %1508 = vdwg.mxu0
  %1509 = vst [vmem:[%s17 + $0x8] sm:$0xff] %v1504
  // Predicated region
  $region70: #{chess_evaluator_forward.1} parent=0 // pred_check
    _
  $region71: #{chess_evaluator_forward.1} parent=0 // pred_check_branch
    %1511 = sbr.rel (0) target = $region73
  $region72: #{chess_evaluator_forward.1} parent=0 // pred_region
    _
  $region73: #{chess_evaluator_forward.1} parent=0 // pred_fallthru
    _
  // Predicated region
  $region74: #{chess_evaluator_forward.1} parent=0 // pred_check
    _
  $region75: #{chess_evaluator_forward.1} parent=0 // pred_check_branch
    %1513 = sbr.rel (0) target = $region77
  $region76: #{chess_evaluator_forward.1} parent=0 // pred_region
    _
  $region77: #{chess_evaluator_forward.1} parent=0 // pred_fallthru
    _

</llo_original>
